<compile_context>
chip_gen: v7x
topology: tpu7x:2x2x1
jax: 0.10.0
libtpu: 0.0.40
codegen_flags: <defaults>
</compile_context>

<pallas_src>
import jax
import jax.numpy as jnp
from jax.experimental import pallas as pl
from jax.experimental.pallas import tpu as pltpu

LANE = 128
SUBLANE = 8


def _round_up(x, m):
    return ((x + m - 1) // m) * m


def _pad2d(a, rows, cols):
    r, c = a.shape
    return jnp.pad(a, ((0, rows - r), (0, cols - c)))


# ---------------------------------------------------------------------------
# Fused Pallas kernels
# ---------------------------------------------------------------------------

def _gin_layer_kernel(num_lin: int, residual: bool):
    """out = relu(MLP(S @ relu(G @ x + ea @ We + be) + (1+eps)*x)) [+ x], all in VMEM."""

    def kernel(eps_ref, x_ref, g_ref, s_ref, ea_ref, ew_ref, eb_ref,
               w_ref, b_ref, o_ref):
        x = x_ref[...]                                            # (Np, Cp) f32
        eps = eps_ref[0]                                          # SMEM scalar

        # --- GINEConv aggregation (bf16 MXU operands, f32 accumulation) ---
        x_j = jnp.dot(g_ref[...], x.astype(jnp.bfloat16),
                      preferred_element_type=jnp.float32)         # (Ep, Cp)
        e_emb = jnp.dot(ea_ref[...], ew_ref[...],
                        preferred_element_type=jnp.float32) + eb_ref[...]
        msg = jnp.maximum(x_j + e_emb, 0.0)                       # relu(x_j + lin(ea))
        aggr = jnp.dot(s_ref[...], msg.astype(jnp.bfloat16),
                       preferred_element_type=jnp.float32)        # (Np, Cp) scatter-add
        h = aggr + (1.0 + eps) * x

        # --- conv MLP (BatchNorm folded into w/b; ReLU between all but last) ---
        for l in range(num_lin):
            z = jnp.dot(h.astype(jnp.bfloat16), w_ref[l],
                        preferred_element_type=jnp.float32) + b_ref[l]
            h = jnp.maximum(z, 0.0) if l < num_lin - 1 else z

        # outer .relu() of GINRes.forward, then residual connection
        h = jnp.maximum(h, 0.0)
        if residual:
            h = h + x
        o_ref[...] = h

    return kernel


def gin_layer(eps, x_p, g_bf, s_bf, ea_bf, ew_bf, eb, w_stack, b_stack, residual):
    np_, cp = x_p.shape
    num_lin = w_stack.shape[0]
    vmem = pl.BlockSpec(memory_space=pltpu.MemorySpace.VMEM)
    smem = pl.BlockSpec(memory_space=pltpu.MemorySpace.SMEM)
    return pl.pallas_call(
        _gin_layer_kernel(num_lin, residual),
        out_shape=jax.ShapeDtypeStruct((np_, cp), jnp.float32),
        in_specs=[smem] + [vmem] * 8,
        out_specs=vmem,
    )(eps, x_p, g_bf, s_bf, ea_bf, ew_bf, eb, w_stack, b_stack)


def _readout_kernel(num_reps: int, num_lin: int):
    """out = sum_r MLP_r(P @ rep_r): pooling, readout MLPs and the sum fused."""

    def kernel(p_ref, reps_ref, w_ref, b_ref, o_ref):
        p_bf = p_ref[...]                                         # (Bp, Np) bf16
        acc = jnp.zeros(o_ref.shape, jnp.float32)
        for r in range(num_reps):
            h = jnp.dot(p_bf, reps_ref[r].astype(jnp.bfloat16),
                        preferred_element_type=jnp.float32)       # global_add_pool
            for l in range(num_lin):
                idx = r * num_lin + l
                z = jnp.dot(h.astype(jnp.bfloat16), w_ref[idx],
                            preferred_element_type=jnp.float32) + b_ref[idx]
                h = jnp.maximum(z, 0.0) if l < num_lin - 1 else z
            acc = acc + h
        o_ref[...] = acc

    return kernel


def readout(p_bf, reps_p, w_stack, b_stack, num_reps, num_lin):
    bp = p_bf.shape[0]
    cp = w_stack.shape[-1]
    vmem = pl.BlockSpec(memory_space=pltpu.MemorySpace.VMEM)
    return pl.pallas_call(
        _readout_kernel(num_reps, num_lin),
        out_shape=jax.ShapeDtypeStruct((bp, cp), jnp.float32),
        in_specs=[vmem] * 4,
        out_specs=vmem,
    )(p_bf, reps_p, w_stack, b_stack)


# ---------------------------------------------------------------------------
# Parameter init (shapes follow the PyTorch module's __init__; eval-mode BN)
# ---------------------------------------------------------------------------

def init_linear(key, din, dout):
    kw, kb = jax.random.split(key)
    bound = 1.0 / jnp.sqrt(jnp.float32(din))
    w = jax.random.uniform(kw, (din, dout), minval=-bound, maxval=bound, dtype=jnp.float32)
    b = jax.random.uniform(kb, (dout,), minval=-bound, maxval=bound, dtype=jnp.float32)
    return w, b


def init_mlp(key, channels):
    """PyG MLP(channel_list, norm='batch_norm', dropout=0.5), eval mode."""
    layers = []
    keys = jax.random.split(key, len(channels) - 1)
    bn_eps = 1e-5
    for i in range(len(channels) - 1):
        w, b = init_linear(keys[i], channels[i], channels[i + 1])
        layer = {"w": w, "b": b}
        if i < len(channels) - 2:                      # non-last: Linear->BN->ReLU->Dropout
            dout = channels[i + 1]
            gamma = jnp.ones((dout,), jnp.float32)
            beta = jnp.zeros((dout,), jnp.float32)
            mean = jnp.zeros((dout,), jnp.float32)
            var = jnp.ones((dout,), jnp.float32)
            scale = gamma / jnp.sqrt(var + bn_eps)
            layer["scale"] = scale
            layer["shift"] = beta - mean * scale
        layers.append(layer)
    return layers


def init_ginres_params(key, in_channels, hidden_channels, out_channels,
                       num_gin_layers, num_mlp_layers, num_mlp_readout_layers,
                       edge_dim=2):
    params = {"convs": [], "linears": []}
    for i in range(num_gin_layers):
        key, k_mlp, k_edge = jax.random.split(key, 3)
        node_dim = in_channels if i == 0 else hidden_channels
        mlp_channels = [node_dim] + [hidden_channels] * num_mlp_layers + [hidden_channels]
        edge_w, edge_b = init_linear(k_edge, edge_dim, node_dim)
        params["convs"].append({
            "mlp": init_mlp(k_mlp, mlp_channels),
            "edge_w": edge_w,
            "edge_b": edge_b,
            "eps": 0.1,                                # train_eps=True (synthetic value)
        })
    readout_dims = [in_channels] + [hidden_channels] * num_gin_layers
    for d in readout_dims:
        key, k = jax.random.split(key)
        channels = [d] + [hidden_channels] * num_mlp_readout_layers + [out_channels]
        params["linears"].append(init_mlp(k, channels))
    return params


# ---------------------------------------------------------------------------
# Kernel-ready parameter prep: fold BN affine, pad to lane tiles, stack layers
# ---------------------------------------------------------------------------

def _fold_and_pad_mlp(layers, cp):
    ws, bs = [], []
    for layer in layers:
        w, b = layer["w"], layer["b"]
        if "scale" in layer:                           # fold BN: w' = w*s, b' = b*s + t
            w = w * layer["scale"][None, :]
            b = b * layer["scale"] + layer["shift"]
        ws.append(_pad2d(w, cp, cp))
        bs.append(_pad2d(b[None, :], 1, cp))
    return jnp.stack(ws).astype(jnp.bfloat16), jnp.stack(bs).astype(jnp.float32)


def prepare_params(params):
    hidden = params["convs"][0]["mlp"][-1]["w"].shape[1]
    in_c = params["convs"][0]["mlp"][0]["w"].shape[0]
    out_c = params["linears"][0][-1]["w"].shape[1]
    edge_dim = params["convs"][0]["edge_w"].shape[0]

    cp = _round_up(max(in_c, hidden, out_c), LANE)
    dp = _round_up(edge_dim, LANE)

    prepped = {"convs": [], "cp": cp, "dp": dp, "out_channels": out_c}
    for conv in params["convs"]:
        w_stack, b_stack = _fold_and_pad_mlp(conv["mlp"], cp)
        prepped["convs"].append({
            "eps": jnp.array([conv["eps"]], jnp.float32),
            "edge_w": _pad2d(conv["edge_w"], dp, cp).astype(jnp.bfloat16),
            "edge_b": _pad2d(conv["edge_b"][None, :], 1, cp).astype(jnp.float32),
            "w": w_stack,
            "b": b_stack,
        })

    r_ws, r_bs = [], []
    for mlp in params["linears"]:
        w_stack, b_stack = _fold_and_pad_mlp(mlp, cp)
        r_ws.append(w_stack)
        r_bs.append(b_stack)
    prepped["readout_w"] = jnp.concatenate(r_ws, axis=0)       # (R*L, cp, cp) bf16
    prepped["readout_b"] = jnp.concatenate(r_bs, axis=0)       # (R*L, 1, cp) f32
    prepped["num_readout_lin"] = r_ws[0].shape[0]
    return prepped


# ---------------------------------------------------------------------------
# Forward pass (3 pallas_calls total for the default config)
# ---------------------------------------------------------------------------

def gin_res_forward(params_p, x, edge_index, edge_attr, batch, batch_size):
    n, _ = x.shape
    e, _ = edge_attr.shape
    cp, dp = params_p["cp"], params_p["dp"]
    out_c = params_p["out_channels"]
    np_ = _round_up(n, LANE)
    ep = _round_up(e, LANE)
    bp = _round_up(batch_size, SUBLANE)

    src, dst = edge_index[0], edge_index[1]

    # Padded, lane-dense operands; one-hot gather/scatter/pool matrices in bf16 (exact).
    x_p = _pad2d(x.astype(jnp.float32), np_, cp)
    g_bf = _pad2d(jax.nn.one_hot(src, np_, dtype=jnp.float32), ep, np_).astype(jnp.bfloat16)
    s_bf = _pad2d(jnp.transpose(jax.nn.one_hot(dst, np_, dtype=jnp.float32)),
                  np_, ep).astype(jnp.bfloat16)
    p_bf = _pad2d(jnp.transpose(jax.nn.one_hot(batch, bp, dtype=jnp.float32)),
                  bp, np_).astype(jnp.bfloat16)
    ea_bf = _pad2d(edge_attr.astype(jnp.float32), ep, dp).astype(jnp.bfloat16)

    reps = [x_p]
    h = x_p
    for i, conv in enumerate(params_p["convs"]):
        h = gin_layer(conv["eps"], h, g_bf, s_bf, ea_bf,
                      conv["edge_w"], conv["edge_b"], conv["w"], conv["b"],
                      residual=(i > 0))                # first layer: no residual
        reps.append(h)

    reps_p = jnp.stack(reps, axis=0)                   # (R, Np, Cp)
    out_full = readout(p_bf, reps_p, params_p["readout_w"], params_p["readout_b"],
                       num_reps=len(reps), num_lin=params_p["num_readout_lin"])
    return out_full[:batch_size, :out_c]


# ---------------------------------------------------------------------------
# Main
# ---------------------------------------------------------------------------

if __name__ == "__main__":
    key = jax.random.PRNGKey(0)

    num_nodes = 16
    num_edges = 32
    in_channels = 4
    hidden_channels = 32
    out_channels = 8
    edge_dim = 2
    num_gin_layers = 2
    num_mlp_layers = 2
    num_mlp_readout_layers = 2
    batch_size = 2

    k_param, k_x, k_src, k_dst, k_ea = jax.random.split(key, 5)
    params = init_ginres_params(k_param, in_channels, hidden_channels, out_channels,
                                num_gin_layers, num_mlp_layers, num_mlp_readout_layers,
                                edge_dim=edge_dim)
    params_p = prepare_params(params)

    x = jax.random.normal(k_x, (num_nodes, in_channels), dtype=jnp.float32)
    src = jax.random.randint(k_src, (num_edges,), 0, num_nodes)
    dst = jax.random.randint(k_dst, (num_edges,), 0, num_nodes)
    edge_index = jnp.stack([src, dst], axis=0)                       # (2, E)
    edge_attr = jax.random.normal(k_ea, (num_edges, edge_dim), dtype=jnp.float32)
    batch = jnp.concatenate([jnp.zeros((num_nodes // 2,), jnp.int32),
                             jnp.ones((num_nodes - num_nodes // 2,), jnp.int32)])

    out = gin_res_forward(params_p, x, edge_index, edge_attr, batch, batch_size)
    out = jax.block_until_ready(out)
    assert out.shape == (batch_size, out_channels)
    assert bool(jnp.all(jnp.isfinite(out)))
    print("KERNEL_OK")
</pallas_src>

<mosaic_0001>
module attributes {stable_mosaic.version = 11 : i64} {
  func.func @kernel(%arg0: memref<1xf32, #tpu.memory_space<smem>>, %arg1: memref<128x128xf32, #tpu.memory_space<vmem>>, %arg2: memref<128x128xbf16, #tpu.memory_space<vmem>>, %arg3: memref<128x128xbf16, #tpu.memory_space<vmem>>, %arg4: memref<128x128xbf16, #tpu.memory_space<vmem>>, %arg5: memref<128x128xbf16, #tpu.memory_space<vmem>>, %arg6: memref<1x128xf32, #tpu.memory_space<vmem>>, %arg7: memref<3x128x128xbf16, #tpu.memory_space<vmem>>, %arg8: memref<3x1x128xf32, #tpu.memory_space<vmem>>, %arg9: memref<128x128xf32, #tpu.memory_space<vmem>>) attributes {dimension_semantics = [], scalar_prefetch = 0 : i64, scratch_operands = 0 : i64, tpu.core_type = #tpu.core_type<tc>} {
    %c0 = arith.constant 0 : index
    %c0_0 = arith.constant 0 : index
    %0 = vector.load %arg1[%c0, %c0_0] : memref<128x128xf32, #tpu.memory_space<vmem>>, vector<128x128xf32>
    %c0_1 = arith.constant 0 : index
    %1 = memref.load %arg0[%c0_1] : memref<1xf32, #tpu.memory_space<smem>>
    %c0_2 = arith.constant 0 : index
    %c0_3 = arith.constant 0 : index
    %2 = vector.load %arg2[%c0_2, %c0_3] : memref<128x128xbf16, #tpu.memory_space<vmem>>, vector<128x128xbf16>
    %3 = arith.truncf %0 : vector<128x128xf32> to vector<128x128xbf16>
    %cst = arith.constant dense<0.000000e+00> : vector<128x128xf32>
    %4 = tpu.matmul %2, %3, %cst {dimension_numbers = #tpu.dot_dimension_numbers<[1], [0], [0], [1], [0, 0, 1, 1], [], []>} : vector<128x128xbf16>, vector<128x128xbf16>, vector<128x128xf32> -> vector<128x128xf32>
    %c0_4 = arith.constant 0 : index
    %c0_5 = arith.constant 0 : index
    %5 = vector.load %arg4[%c0_4, %c0_5] : memref<128x128xbf16, #tpu.memory_space<vmem>>, vector<128x128xbf16>
    %c0_6 = arith.constant 0 : index
    %c0_7 = arith.constant 0 : index
    %6 = vector.load %arg5[%c0_6, %c0_7] : memref<128x128xbf16, #tpu.memory_space<vmem>>, vector<128x128xbf16>
    %cst_8 = arith.constant dense<0.000000e+00> : vector<128x128xf32>
    %7 = tpu.matmul %5, %6, %cst_8 {dimension_numbers = #tpu.dot_dimension_numbers<[1], [0], [0], [1], [0, 0, 1, 1], [], []>} : vector<128x128xbf16>, vector<128x128xbf16>, vector<128x128xf32> -> vector<128x128xf32>
    %c0_9 = arith.constant 0 : index
    %c0_10 = arith.constant 0 : index
    %8 = vector.load %arg6[%c0_9, %c0_10] : memref<1x128xf32, #tpu.memory_space<vmem>>, vector<1x128xf32>
    %9 = vector.broadcast %8 : vector<1x128xf32> to vector<128x128xf32>
    %10 = arith.addf %7, %9 : vector<128x128xf32>
    %11 = arith.addf %4, %10 : vector<128x128xf32>
    %cst_11 = arith.constant 0.000000e+00 : f32
    %12 = vector.broadcast %cst_11 : f32 to vector<128x128xf32>
    %13 = arith.maximumf %11, %12 : vector<128x128xf32>
    %c0_12 = arith.constant 0 : index
    %c0_13 = arith.constant 0 : index
    %14 = vector.load %arg3[%c0_12, %c0_13] : memref<128x128xbf16, #tpu.memory_space<vmem>>, vector<128x128xbf16>
    %15 = arith.truncf %13 : vector<128x128xf32> to vector<128x128xbf16>
    %cst_14 = arith.constant dense<0.000000e+00> : vector<128x128xf32>
    %16 = tpu.matmul %14, %15, %cst_14 {dimension_numbers = #tpu.dot_dimension_numbers<[1], [0], [0], [1], [0, 0, 1, 1], [], []>} : vector<128x128xbf16>, vector<128x128xbf16>, vector<128x128xf32> -> vector<128x128xf32>
    %cst_15 = arith.constant 1.000000e+00 : f32
    %17 = arith.addf %cst_15, %1 : f32
    %18 = vector.broadcast %17 : f32 to vector<128x128xf32>
    %19 = arith.mulf %18, %0 : vector<128x128xf32>
    %20 = arith.addf %16, %19 : vector<128x128xf32>
    %21 = arith.truncf %20 : vector<128x128xf32> to vector<128x128xbf16>
    %c0_16 = arith.constant 0 : index
    %c0_17 = arith.constant 0 : index
    %c0_18 = arith.constant 0 : index
    %22 = vector.load %arg7[%c0_16, %c0_17, %c0_18] : memref<3x128x128xbf16, #tpu.memory_space<vmem>>, vector<1x128x128xbf16>
    %23 = vector.shape_cast %22 : vector<1x128x128xbf16> to vector<128x128xbf16>
    %cst_19 = arith.constant dense<0.000000e+00> : vector<128x128xf32>
    %24 = tpu.matmul %21, %23, %cst_19 {dimension_numbers = #tpu.dot_dimension_numbers<[1], [0], [0], [1], [0, 0, 1, 1], [], []>} : vector<128x128xbf16>, vector<128x128xbf16>, vector<128x128xf32> -> vector<128x128xf32>
    %c0_20 = arith.constant 0 : index
    %c0_21 = arith.constant 0 : index
    %c0_22 = arith.constant 0 : index
    %25 = vector.load %arg8[%c0_20, %c0_21, %c0_22] : memref<3x1x128xf32, #tpu.memory_space<vmem>>, vector<1x1x128xf32>
    %26 = vector.shape_cast %25 : vector<1x1x128xf32> to vector<1x128xf32>
    %27 = vector.broadcast %26 : vector<1x128xf32> to vector<128x128xf32>
    %28 = arith.addf %24, %27 : vector<128x128xf32>
    %cst_23 = arith.constant 0.000000e+00 : f32
    %29 = vector.broadcast %cst_23 : f32 to vector<128x128xf32>
    %30 = arith.maximumf %28, %29 : vector<128x128xf32>
    %31 = arith.truncf %30 : vector<128x128xf32> to vector<128x128xbf16>
    %c1 = arith.constant 1 : index
    %c0_24 = arith.constant 0 : index
    %c0_25 = arith.constant 0 : index
    %32 = vector.load %arg7[%c1, %c0_24, %c0_25] : memref<3x128x128xbf16, #tpu.memory_space<vmem>>, vector<1x128x128xbf16>
    %33 = vector.shape_cast %32 : vector<1x128x128xbf16> to vector<128x128xbf16>
    %cst_26 = arith.constant dense<0.000000e+00> : vector<128x128xf32>
    %34 = tpu.matmul %31, %33, %cst_26 {dimension_numbers = #tpu.dot_dimension_numbers<[1], [0], [0], [1], [0, 0, 1, 1], [], []>} : vector<128x128xbf16>, vector<128x128xbf16>, vector<128x128xf32> -> vector<128x128xf32>
    %c1_27 = arith.constant 1 : index
    %c0_28 = arith.constant 0 : index
    %c0_29 = arith.constant 0 : index
    %35 = vector.load %arg8[%c1_27, %c0_28, %c0_29] : memref<3x1x128xf32, #tpu.memory_space<vmem>>, vector<1x1x128xf32>
    %36 = vector.shape_cast %35 : vector<1x1x128xf32> to vector<1x128xf32>
    %37 = vector.broadcast %36 : vector<1x128xf32> to vector<128x128xf32>
    %38 = arith.addf %34, %37 : vector<128x128xf32>
    %cst_30 = arith.constant 0.000000e+00 : f32
    %39 = vector.broadcast %cst_30 : f32 to vector<128x128xf32>
    %40 = arith.maximumf %38, %39 : vector<128x128xf32>
    %41 = arith.truncf %40 : vector<128x128xf32> to vector<128x128xbf16>
    %c2 = arith.constant 2 : index
    %c0_31 = arith.constant 0 : index
    %c0_32 = arith.constant 0 : index
    %42 = vector.load %arg7[%c2, %c0_31, %c0_32] : memref<3x128x128xbf16, #tpu.memory_space<vmem>>, vector<1x128x128xbf16>
    %43 = vector.shape_cast %42 : vector<1x128x128xbf16> to vector<128x128xbf16>
    %cst_33 = arith.constant dense<0.000000e+00> : vector<128x128xf32>
    %44 = tpu.matmul %41, %43, %cst_33 {dimension_numbers = #tpu.dot_dimension_numbers<[1], [0], [0], [1], [0, 0, 1, 1], [], []>} : vector<128x128xbf16>, vector<128x128xbf16>, vector<128x128xf32> -> vector<128x128xf32>
    %c2_34 = arith.constant 2 : index
    %c0_35 = arith.constant 0 : index
    %c0_36 = arith.constant 0 : index
    %45 = vector.load %arg8[%c2_34, %c0_35, %c0_36] : memref<3x1x128xf32, #tpu.memory_space<vmem>>, vector<1x1x128xf32>
    %46 = vector.shape_cast %45 : vector<1x1x128xf32> to vector<1x128xf32>
    %47 = vector.broadcast %46 : vector<1x128xf32> to vector<128x128xf32>
    %48 = arith.addf %44, %47 : vector<128x128xf32>
    %cst_37 = arith.constant 0.000000e+00 : f32
    %49 = vector.broadcast %cst_37 : f32 to vector<128x128xf32>
    %50 = arith.maximumf %48, %49 : vector<128x128xf32>
    %c0_38 = arith.constant 0 : index
    %c0_39 = arith.constant 0 : index
    %51 = vector.load %arg9[%c0_38, %c0_39] : memref<128x128xf32, #tpu.memory_space<vmem>>, vector<128x128xf32>
    tpu.vector_store %arg9[%c0_38, %c0_39], %50 {strides = array<i32>} : memref<128x128xf32, #tpu.memory_space<vmem>>, vector<128x128xf32>,
    return
  }
}

</mosaic_0001>

<llo_original>
// kernel: tpu_custom_call.1
$region0: #{tpu_custom_call.1}
  #allocation0 [shape = 'u32[]', space=smem, size = 0x4, offset = 0x4, fixed_abs, tag = 'smem constant byte address 0x4 - core index']
  #allocation1 [shape = 'u32[144,128]{1,0:T(1,128)}', space=vmem, size = 0x12000, scoped, tag = 'internal scratch']
  #allocation2 [shape = 'f32[1]{0:T(128)S(6)}', space=smem, size = 0x200, scoped, tag = 'scoped memory for tpu_custom_call.1']
  %s0 = inlined_call_operand.<no memory space> [shape: f32[1], index: 0, kind: input, shape index: {}]
  %s1 = inlined_call_operand.hbm [shape: f32[128,128], index: 1, kind: input, shape index: {}]
  %s2 = inlined_call_operand.hbm [shape: bf16[128,128], index: 2, kind: input, shape index: {}]
  %s3 = inlined_call_operand.hbm [shape: bf16[128,128], index: 3, kind: input, shape index: {}]
  %s4 = inlined_call_operand.hbm [shape: bf16[128,128], index: 4, kind: input, shape index: {}]
  %s5 = inlined_call_operand.hbm [shape: bf16[128,128], index: 5, kind: input, shape index: {}]
  %s6 = inlined_call_operand.vmem [shape: f32[1,128], index: 6, kind: input, shape index: {}]
  %s7 = inlined_call_operand.hbm [shape: bf16[3,128,128], index: 7, kind: input, shape index: {}]
  %s8 = inlined_call_operand.vmem [shape: f32[3,1,128], index: 8, kind: input, shape index: {}]
  %s9 = inlined_call_operand.hbm [shape: f32[128,128], index: 9, kind: output, shape index: {}]
  %s10 = sld [smem:[#allocation0]]
  $region70: #{tpu_custom_call.1} parent=0
    _
  %s12 = ssub.s32 1, %s10
  %s13 = scalar_select 0, %s12, %s10
  %14 = sst [smem:[#allocation2]] %s0
  $region1: #{tpu_custom_call.1} parent=0
    #allocation3 [shape = 'u8[65536]{0}', space=vmem, size = 0x10000, scoped, tag = 'input window, operand 1, single buffered']
    #allocation4 [shape = 's32[1]{0}', space=sflag, size = 0x4, scoped, tag = 'scoped memory for tpu_custom_call.1']
    #allocation5 [shape = 's32[1]{0}', space=sflag, size = 0x4, scoped, tag = 'scoped memory for tpu_custom_call.1']
    #allocation6 [shape = 'u8[32768]{0}', space=vmem, size = 0x8000, scoped, tag = 'input window, operand 2, single buffered']
    #allocation7 [shape = 's32[1]{0}', space=sflag, size = 0x4, scoped, tag = 'scoped memory for tpu_custom_call.1']
    #allocation8 [shape = 'u8[32768]{0}', space=vmem, size = 0x8000, scoped, tag = 'input window, operand 3, single buffered']
    #allocation9 [shape = 'u8[32768]{0}', space=vmem, size = 0x8000, scoped, tag = 'input window, operand 4, single buffered']
    #allocation10 [shape = 's32[1]{0}', space=sflag, size = 0x4, scoped, tag = 'scoped memory for tpu_custom_call.1']
    #allocation11 [shape = 'u8[32768]{0}', space=vmem, size = 0x8000, scoped, tag = 'input window, operand 5, single buffered']
    #allocation12 [shape = 'u8[98304]{0}', space=vmem, size = 0x18000, scoped, tag = 'input window, operand 7, single buffered']
    #allocation13 [shape = 's32[1]{0}', space=sflag, size = 0x4, scoped, tag = 'scoped memory for tpu_custom_call.1']
    #allocation14 [shape = 'u8[65536]{0}', space=vmem, size = 0x10000, scoped, tag = 'output window, operand 0, single buffered']
    %15 = vsyncpa [#allocation4], 0
    %16 = vsyncpa [#allocation7], 0
    %17 = vsyncpa [#allocation10], 0
    %18 = vsyncpa [#allocation13], 0
    %19 = vsyncpa [#allocation5], 0
    // Predicated region
    $region2: #{tpu_custom_call.1} parent=1 // pred_check
      _
    $region3: #{tpu_custom_call.1} parent=1 // pred_check_branch
      %21 = sbr.rel (0) target = $region5
    $region4: #{tpu_custom_call.1} parent=1 // pred_region
      _
    $region5: #{tpu_custom_call.1} parent=1 // pred_fallthru
      _
    // Predicated region
    $region6: #{tpu_custom_call.1} parent=1 // pred_check
      _
    $region7: #{tpu_custom_call.1} parent=1 // pred_check_branch
      %23 = sbr.rel (0) target = $region9
    $region8: #{tpu_custom_call.1} parent=1 // pred_region
      %s25 = ssub.s32 2048, 2048
      %26 = vsyncadd [#allocation4], %s25
      %s27 = sshll.u32 [#allocation3], 4
      %s28 = int_to_ptr.vmem [resolvable:$true] %s27
      %33 = dma.hbm_to_vmem [thread:$0]  %s1, 2048, %s28, [#allocation4], 128, 128, 8
    $region9: #{tpu_custom_call.1} parent=1 // pred_fallthru
      _
    // Predicated region
    $region10: #{tpu_custom_call.1} parent=1 // pred_check
      _
    $region11: #{tpu_custom_call.1} parent=1 // pred_check_branch
      %35 = sbr.rel (0) target = $region13
    $region12: #{tpu_custom_call.1} parent=1 // pred_region
      %s37 = ssub.s32 1024, 1024
      %38 = vsyncadd [#allocation7], %s37
      %s39 = sshll.u32 [#allocation6], 4
      %s40 = int_to_ptr.vmem [resolvable:$true] %s39
      %45 = dma.hbm_to_vmem [thread:$0]  %s2, 1024, %s40, [#allocation7], 64, 64, 4
    $region13: #{tpu_custom_call.1} parent=1 // pred_fallthru
      _
    // Predicated region
    $region14: #{tpu_custom_call.1} parent=1 // pred_check
      _
    $region15: #{tpu_custom_call.1} parent=1 // pred_check_branch
      %47 = sbr.rel (0) target = $region17
    $region16: #{tpu_custom_call.1} parent=1 // pred_region
      %s49 = ssub.s32 1024, 1024
      %50 = vsyncadd [#allocation7], %s49
      %s51 = sshll.u32 [#allocation8], 4
      %s52 = int_to_ptr.vmem [resolvable:$true] %s51
      %57 = dma.hbm_to_vmem [thread:$0]  %s3, 1024, %s52, [#allocation7], 64, 64, 4
    $region17: #{tpu_custom_call.1} parent=1 // pred_fallthru
      _
    // Predicated region
    $region18: #{tpu_custom_call.1} parent=1 // pred_check
      _
    $region19: #{tpu_custom_call.1} parent=1 // pred_check_branch
      %59 = sbr.rel (0) target = $region21
    $region20: #{tpu_custom_call.1} parent=1 // pred_region
      %s61 = ssub.s32 1024, 1024
      %62 = vsyncadd [#allocation10], %s61
      %s63 = sshll.u32 [#allocation9], 4
      %s64 = int_to_ptr.vmem [resolvable:$true] %s63
      %69 = dma.hbm_to_vmem [thread:$0]  %s4, 1024, %s64, [#allocation10], 64, 64, 4
    $region21: #{tpu_custom_call.1} parent=1 // pred_fallthru
      _
    // Predicated region
    $region22: #{tpu_custom_call.1} parent=1 // pred_check
      _
    $region23: #{tpu_custom_call.1} parent=1 // pred_check_branch
      %71 = sbr.rel (0) target = $region25
    $region24: #{tpu_custom_call.1} parent=1 // pred_region
      %s73 = ssub.s32 1024, 1024
      %74 = vsyncadd [#allocation10], %s73
      %s75 = sshll.u32 [#allocation11], 4
      %s76 = int_to_ptr.vmem [resolvable:$true] %s75
      %81 = dma.hbm_to_vmem [thread:$0]  %s5, 1024, %s76, [#allocation10], 64, 64, 4
    $region25: #{tpu_custom_call.1} parent=1 // pred_fallthru
      _
    // Predicated region
    $region26: #{tpu_custom_call.1} parent=1 // pred_check
      _
    $region27: #{tpu_custom_call.1} parent=1 // pred_check_branch
      %83 = sbr.rel (0) target = $region29
    $region28: #{tpu_custom_call.1} parent=1 // pred_region
      _
    $region29: #{tpu_custom_call.1} parent=1 // pred_fallthru
      _
    // Predicated region
    $region30: #{tpu_custom_call.1} parent=1 // pred_check
      _
    $region31: #{tpu_custom_call.1} parent=1 // pred_check_branch
      %85 = sbr.rel (0) target = $region33
    $region32: #{tpu_custom_call.1} parent=1 // pred_region
      %s87 = ssub.s32 3072, 3072
      %88 = vsyncadd [#allocation13], %s87
      %s89 = sshll.u32 [#allocation12], 4
      %s90 = int_to_ptr.vmem [resolvable:$true] %s89
      %95 = dma.hbm_to_vmem [thread:$0]  %s7, 3072, %s90, [#allocation13], 64, 64, 4
    $region33: #{tpu_custom_call.1} parent=1 // pred_fallthru
      _
    // Predicated region
    $region34: #{tpu_custom_call.1} parent=1 // pred_check
      _
    $region35: #{tpu_custom_call.1} parent=1 // pred_check_branch
      %97 = sbr.rel (0) target = $region37
    $region36: #{tpu_custom_call.1} parent=1 // pred_region
      _
    $region37: #{tpu_custom_call.1} parent=1 // pred_fallthru
      _
    // Predicated region
    $region38: #{tpu_custom_call.1} parent=1 // pred_check
      _
    $region39: #{tpu_custom_call.1} parent=1 // pred_check_branch
      %99 = sbr.rel (0) target = $region41
    $region40: #{tpu_custom_call.1} parent=1 // pred_region
      %100 = dma.done [#allocation4], 2048
    $region41: #{tpu_custom_call.1} parent=1 // pred_fallthru
      _
    // Predicated region
    $region42: #{tpu_custom_call.1} parent=1 // pred_check
      _
    $region43: #{tpu_custom_call.1} parent=1 // pred_check_branch
      %102 = sbr.rel (0) target = $region45
    $region44: #{tpu_custom_call.1} parent=1 // pred_region
      %103 = dma.done [#allocation7], 1024
    $region45: #{tpu_custom_call.1} parent=1 // pred_fallthru
      _
    // Predicated region
    $region46: #{tpu_custom_call.1} parent=1 // pred_check
      _
    $region47: #{tpu_custom_call.1} parent=1 // pred_check_branch
      %105 = sbr.rel (0) target = $region49
    $region48: #{tpu_custom_call.1} parent=1 // pred_region
      %106 = dma.done [#allocation7], 1024
    $region49: #{tpu_custom_call.1} parent=1 // pred_fallthru
      _
    // Predicated region
    $region50: #{tpu_custom_call.1} parent=1 // pred_check
      _
    $region51: #{tpu_custom_call.1} parent=1 // pred_check_branch
      %108 = sbr.rel (0) target = $region53
    $region52: #{tpu_custom_call.1} parent=1 // pred_region
      %109 = dma.done [#allocation10], 1024
    $region53: #{tpu_custom_call.1} parent=1 // pred_fallthru
      _
    // Predicated region
    $region54: #{tpu_custom_call.1} parent=1 // pred_check
      _
    $region55: #{tpu_custom_call.1} parent=1 // pred_check_branch
      %111 = sbr.rel (0) target = $region57
    $region56: #{tpu_custom_call.1} parent=1 // pred_region
      %112 = dma.done [#allocation10], 1024
    $region57: #{tpu_custom_call.1} parent=1 // pred_fallthru
      _
    // Predicated region
    $region58: #{tpu_custom_call.1} parent=1 // pred_check
      _
    $region59: #{tpu_custom_call.1} parent=1 // pred_check_branch
      %114 = sbr.rel (0) target = $region61
    $region60: #{tpu_custom_call.1} parent=1 // pred_region
      %115 = dma.done [#allocation13], 3072
    $region61: #{tpu_custom_call.1} parent=1 // pred_fallthru
      _
    %v117 = vld [vmem:[#allocation3] sm:$0xff]
    %v118 = vld [vmem:[#allocation3 + $0x8] sm:$0xff]
    %v119 = vld [vmem:[#allocation3 + $0x10] sm:$0xff]
    %v120 = vld [vmem:[#allocation3 + $0x18] sm:$0xff]
    %v121 = vld [vmem:[#allocation3 + $0x20] sm:$0xff]
    %v122 = vld [vmem:[#allocation3 + $0x28] sm:$0xff]
    %v123 = vld [vmem:[#allocation3 + $0x30] sm:$0xff]
    %v124 = vld [vmem:[#allocation3 + $0x38] sm:$0xff]
    %v125 = vld [vmem:[#allocation3 + $0x40] sm:$0xff]
    %v126 = vld [vmem:[#allocation3 + $0x48] sm:$0xff]
    %v127 = vld [vmem:[#allocation3 + $0x50] sm:$0xff]
    %v128 = vld [vmem:[#allocation3 + $0x58] sm:$0xff]
    %v129 = vld [vmem:[#allocation3 + $0x60] sm:$0xff]
    %v130 = vld [vmem:[#allocation3 + $0x68] sm:$0xff]
    %v131 = vld [vmem:[#allocation3 + $0x70] sm:$0xff]
    %v132 = vld [vmem:[#allocation3 + $0x78] sm:$0xff]
    %s133 = sld [smem:[#allocation2]]
    %v134 = vld [vmem:[#allocation6] sm:$0xf]
    %v135 = vld [vmem:[#allocation6 + $0x4] sm:$0xf]
    %v136 = vld [vmem:[#allocation6 + $0x8] sm:$0xf]
    %v137 = vld [vmem:[#allocation6 + $0xc] sm:$0xf]
    %v138 = vld [vmem:[#allocation6 + $0x10] sm:$0xf]
    %v139 = vld [vmem:[#allocation6 + $0x14] sm:$0xf]
    %v140 = vld [vmem:[#allocation6 + $0x18] sm:$0xf]
    %v141 = vld [vmem:[#allocation6 + $0x1c] sm:$0xf]
    %v142 = vld [vmem:[#allocation6 + $0x20] sm:$0xf]
    %v143 = vld [vmem:[#allocation6 + $0x24] sm:$0xf]
    %v144 = vld [vmem:[#allocation6 + $0x28] sm:$0xf]
    %v145 = vld [vmem:[#allocation6 + $0x2c] sm:$0xf]
    %v146 = vld [vmem:[#allocation6 + $0x30] sm:$0xf]
    %v147 = vld [vmem:[#allocation6 + $0x34] sm:$0xf]
    %v148 = vld [vmem:[#allocation6 + $0x38] sm:$0xf]
    %v149 = vld [vmem:[#allocation6 + $0x3c] sm:$0xf]
    %v150 = vpack.c.bf16 %v118, %v117
    %v151 = vpack.c.bf16 %v120, %v119
    %v152 = vpack.c.bf16 %v122, %v121
    %v153 = vpack.c.bf16 %v124, %v123
    %v154 = vpack.c.bf16 %v126, %v125
    %v155 = vpack.c.bf16 %v128, %v127
    %v156 = vpack.c.bf16 %v130, %v129
    %v157 = vpack.c.bf16 %v132, %v131
    %v158 = vld [vmem:[#allocation9] sm:$0xf]
    %v159 = vld [vmem:[#allocation9 + $0x4] sm:$0xf]
    %v160 = vld [vmem:[#allocation9 + $0x8] sm:$0xf]
    %v161 = vld [vmem:[#allocation9 + $0xc] sm:$0xf]
    %v162 = vld [vmem:[#allocation9 + $0x10] sm:$0xf]
    %v163 = vld [vmem:[#allocation9 + $0x14] sm:$0xf]
    %v164 = vld [vmem:[#allocation9 + $0x18] sm:$0xf]
    %v165 = vld [vmem:[#allocation9 + $0x1c] sm:$0xf]
    %v166 = vld [vmem:[#allocation9 + $0x20] sm:$0xf]
    %v167 = vld [vmem:[#allocation9 + $0x24] sm:$0xf]
    %v168 = vld [vmem:[#allocation9 + $0x28] sm:$0xf]
    %v169 = vld [vmem:[#allocation9 + $0x2c] sm:$0xf]
    %v170 = vld [vmem:[#allocation9 + $0x30] sm:$0xf]
    %v171 = vld [vmem:[#allocation9 + $0x34] sm:$0xf]
    %v172 = vld [vmem:[#allocation9 + $0x38] sm:$0xf]
    %v173 = vld [vmem:[#allocation9 + $0x3c] sm:$0xf]
    %v174 = vld [vmem:[#allocation11] sm:$0xf]
    %v175 = vld [vmem:[#allocation11 + $0x4] sm:$0xf]
    %v176 = vld [vmem:[#allocation11 + $0x8] sm:$0xf]
    %v177 = vld [vmem:[#allocation11 + $0xc] sm:$0xf]
    %v178 = vld [vmem:[#allocation11 + $0x10] sm:$0xf]
    %v179 = vld [vmem:[#allocation11 + $0x14] sm:$0xf]
    %v180 = vld [vmem:[#allocation11 + $0x18] sm:$0xf]
    %v181 = vld [vmem:[#allocation11 + $0x1c] sm:$0xf]
    %v182 = vld [vmem:[#allocation11 + $0x20] sm:$0xf]
    %v183 = vld [vmem:[#allocation11 + $0x24] sm:$0xf]
    %v184 = vld [vmem:[#allocation11 + $0x28] sm:$0xf]
    %v185 = vld [vmem:[#allocation11 + $0x2c] sm:$0xf]
    %v186 = vld [vmem:[#allocation11 + $0x30] sm:$0xf]
    %v187 = vld [vmem:[#allocation11 + $0x34] sm:$0xf]
    %v188 = vld [vmem:[#allocation11 + $0x38] sm:$0xf]
    %v189 = vld [vmem:[#allocation11 + $0x3c] sm:$0xf]
    %v190 = vld [vmem:[%s6] sm:$0x1]
    %v192 = vlaneseq
    %v193 = vshrl.u32 %v192, 7
    %v194 = vsub.s32 0, %v193
    %v195 = vrot.slane %v190, %v194
    %v213 = vunpack.c.l.b16 %v158
    %v214 = vunpack.c.l.b16 %v159
    %v215 = vunpack.c.l.b16 %v160
    %v216 = vunpack.c.l.b16 %v161
    %v217 = vunpack.c.l.b16 %v162
    %v218 = vunpack.c.l.b16 %v163
    %v219 = vunpack.c.l.b16 %v164
    %v220 = vunpack.c.l.b16 %v165
    %v221 = vunpack.c.l.b16 %v166
    %v222 = vunpack.c.l.b16 %v167
    %v223 = vunpack.c.l.b16 %v168
    %v224 = vunpack.c.l.b16 %v169
    %v225 = vunpack.c.l.b16 %v170
    %v226 = vunpack.c.l.b16 %v171
    %v227 = vunpack.c.l.b16 %v172
    %v228 = vunpack.c.l.b16 %v173
    %v229 = vpack.c.b16 %v214, %v213
    %v230 = vpack.c.b16 %v216, %v215
    %v231 = vpack.c.b16 %v218, %v217
    %v232 = vpack.c.b16 %v220, %v219
    %v233 = vpack.c.b16 %v222, %v221
    %v234 = vpack.c.b16 %v224, %v223
    %v235 = vpack.c.b16 %v226, %v225
    %v236 = vpack.c.b16 %v228, %v227
    %v261 = vunpack.c.l.b16 %v174
    %v262 = vunpack.c.l.b16 %v175
    %v263 = vunpack.c.l.b16 %v176
    %v264 = vunpack.c.l.b16 %v177
    %v265 = vunpack.c.l.b16 %v178
    %v266 = vunpack.c.l.b16 %v179
    %v267 = vunpack.c.l.b16 %v180
    %v268 = vunpack.c.l.b16 %v181
    %v269 = vunpack.c.l.b16 %v182
    %v270 = vunpack.c.l.b16 %v183
    %v271 = vunpack.c.l.b16 %v184
    %v272 = vunpack.c.l.b16 %v185
    %v273 = vunpack.c.l.b16 %v186
    %v274 = vunpack.c.l.b16 %v187
    %v275 = vunpack.c.l.b16 %v188
    %v276 = vunpack.c.l.b16 %v189
    %v277 = vpack.c.b16 %v262, %v261
    %v278 = vpack.c.b16 %v264, %v263
    %v279 = vpack.c.b16 %v266, %v265
    %v280 = vpack.c.b16 %v268, %v267
    %v281 = vpack.c.b16 %v270, %v269
    %v282 = vpack.c.b16 %v272, %v271
    %v283 = vpack.c.b16 %v274, %v273
    %v284 = vpack.c.b16 %v276, %v275
    %293 = vmatprep.subr.bf16.mxu0 0
    %294 = vmatpush1.bf16.msra.mxu0 %v277
    %295 = vmatprep.subr.bf16.mxu0 0
    %296 = vmatpush1.bf16.msra.mxu0 %v278
    %297 = vmatprep.subr.bf16.mxu0 0
    %298 = vmatpush1.bf16.msra.mxu0 %v279
    %299 = vmatprep.subr.bf16.mxu0 0
    %300 = vmatpush1.bf16.msra.mxu0 %v280
    %301 = vmatprep.subr.bf16.mxu0 0
    %302 = vmatpush1.bf16.msra.mxu0 %v281
    %303 = vmatprep.subr.bf16.mxu0 0
    %304 = vmatpush1.bf16.msra.mxu0 %v282
    %305 = vmatprep.subr.bf16.mxu0 0
    %306 = vmatpush1.bf16.msra.mxu0 %v283
    %307 = vmatprep.subr.bf16.mxu0 0
    %308 = vmatpush1.bf16.msra.mxu0 %v284
    %309 = vmatprep.subr.bf16.mxu0 0
    %310 = vmatpush1.bf16.msra.mxu0 0
    %311 = vmatprep.subr.bf16.mxu0 0
    %312 = vmatpush1.bf16.msra.mxu0 0
    %313 = vmatprep.subr.bf16.mxu0 0
    %314 = vmatpush1.bf16.msra.mxu0 0
    %315 = vmatprep.subr.bf16.mxu0 0
    %316 = vmatpush1.bf16.msra.mxu0 0
    %317 = vmatprep.subr.bf16.mxu0 0
    %318 = vmatpush1.bf16.msra.mxu0 0
    %319 = vmatprep.subr.bf16.mxu0 0
    %320 = vmatpush1.bf16.msra.mxu0 0
    %321 = vmatprep.subr.bf16.mxu0 0
    %322 = vmatpush1.bf16.msra.mxu0 0
    %323 = vmatprep.subr.bf16.mxu0 0
    %324 = vmatpush1.bf16.msra.mxu0 0
    %325 = vmatprep.mubr.bf16.mxu0 0
    %326 = vmatmul.mubr.bf16.gmra.mrb[0].mxu0 %v229
    %v327 = vpop.f32.mrb[0].mxu0
    %v328 = vadd.f32 %v195, %v327
    %v329 = vpop.f32.mrb[0].mxu0
    %v330 = vpop.f32.mrb[0].mxu0
    %v331 = vadd.f32 %v195, %v330
    %v332 = vpop.f32.mrb[0].mxu0
    %333 = vmatprep.mubr.bf16.mxu0 0
    %334 = vmatmul.mubr.bf16.gmra.mrb[0].mxu0 %v230
    %v335 = vpop.f32.mrb[0].mxu0
    %v336 = vadd.f32 %v195, %v335
    %v337 = vpop.f32.mrb[0].mxu0
    %v338 = vpop.f32.mrb[0].mxu0
    %v339 = vadd.f32 %v195, %v338
    %v340 = vpop.f32.mrb[0].mxu0
    %341 = vmatprep.mubr.bf16.mxu0 0
    %342 = vmatmul.mubr.bf16.gmra.mrb[0].mxu0 %v231
    %v343 = vpop.f32.mrb[0].mxu0
    %v344 = vadd.f32 %v195, %v343
    %v345 = vpop.f32.mrb[0].mxu0
    %v346 = vpop.f32.mrb[0].mxu0
    %v347 = vadd.f32 %v195, %v346
    %v348 = vpop.f32.mrb[0].mxu0
    %349 = vmatprep.mubr.bf16.mxu0 0
    %350 = vmatmul.mubr.bf16.gmra.mrb[0].mxu0 %v232
    %v351 = vpop.f32.mrb[0].mxu0
    %v352 = vadd.f32 %v195, %v351
    %v353 = vpop.f32.mrb[0].mxu0
    %v354 = vpop.f32.mrb[0].mxu0
    %v355 = vadd.f32 %v195, %v354
    %v356 = vpop.f32.mrb[0].mxu0
    %357 = vmatprep.mubr.bf16.mxu0 0
    %358 = vmatmul.mubr.bf16.gmra.mrb[0].mxu0 %v233
    %v359 = vpop.f32.mrb[0].mxu0
    %v360 = vadd.f32 %v195, %v359
    %v361 = vpop.f32.mrb[0].mxu0
    %v362 = vpop.f32.mrb[0].mxu0
    %v363 = vadd.f32 %v195, %v362
    %v364 = vpop.f32.mrb[0].mxu0
    %365 = vmatprep.mubr.bf16.mxu0 0
    %366 = vmatmul.mubr.bf16.gmra.mrb[0].mxu0 %v234
    %v367 = vpop.f32.mrb[0].mxu0
    %v368 = vadd.f32 %v195, %v367
    %v369 = vpop.f32.mrb[0].mxu0
    %v370 = vpop.f32.mrb[0].mxu0
    %v371 = vadd.f32 %v195, %v370
    %v372 = vpop.f32.mrb[0].mxu0
    %373 = vmatprep.mubr.bf16.mxu0 0
    %374 = vmatmul.mubr.bf16.gmra.mrb[0].mxu0 %v235
    %v375 = vpop.f32.mrb[0].mxu0
    %v376 = vadd.f32 %v195, %v375
    %v377 = vpop.f32.mrb[0].mxu0
    %v378 = vpop.f32.mrb[0].mxu0
    %v379 = vadd.f32 %v195, %v378
    %v380 = vpop.f32.mrb[0].mxu0
    %381 = vmatprep.mubr.bf16.mxu0 0
    %382 = vmatmul.mubr.bf16.gmra.mrb[0].mxu0 %v236
    %v383 = vpop.f32.mrb[0].mxu0
    %v384 = vadd.f32 %v195, %v383
    %v385 = vpop.f32.mrb[0].mxu0
    %v386 = vpop.f32.mrb[0].mxu0
    %v387 = vadd.f32 %v195, %v386
    %v388 = vpop.f32.mrb[0].mxu0
    %389 = vdwg.mxu0
    %v406 = vunpack.c.l.b16 %v134
    %v407 = vunpack.c.l.b16 %v135
    %v408 = vunpack.c.l.b16 %v136
    %v409 = vunpack.c.l.b16 %v137
    %v410 = vunpack.c.l.b16 %v138
    %v411 = vunpack.c.l.b16 %v139
    %v412 = vunpack.c.l.b16 %v140
    %v413 = vunpack.c.l.b16 %v141
    %v414 = vunpack.c.l.b16 %v142
    %v415 = vunpack.c.l.b16 %v143
    %v416 = vunpack.c.l.b16 %v144
    %v417 = vunpack.c.l.b16 %v145
    %v418 = vunpack.c.l.b16 %v146
    %v419 = vunpack.c.l.b16 %v147
    %v420 = vunpack.c.l.b16 %v148
    %v421 = vunpack.c.l.b16 %v149
    %v422 = vpack.c.b16 %v407, %v406
    %v423 = vpack.c.b16 %v409, %v408
    %v424 = vpack.c.b16 %v411, %v410
    %v425 = vpack.c.b16 %v413, %v412
    %v426 = vpack.c.b16 %v415, %v414
    %v427 = vpack.c.b16 %v417, %v416
    %v428 = vpack.c.b16 %v419, %v418
    %v429 = vpack.c.b16 %v421, %v420
    %438 = vmatprep.subr.bf16.mxu0 0
    %439 = vmatpush1.bf16.msra.mxu0 %v150
    %440 = vmatprep.subr.bf16.mxu0 0
    %441 = vmatpush1.bf16.msra.mxu0 %v151
    %442 = vmatprep.subr.bf16.mxu0 0
    %443 = vmatpush1.bf16.msra.mxu0 %v152
    %444 = vmatprep.subr.bf16.mxu0 0
    %445 = vmatpush1.bf16.msra.mxu0 %v153
    %446 = vmatprep.subr.bf16.mxu0 0
    %447 = vmatpush1.bf16.msra.mxu0 %v154
    %448 = vmatprep.subr.bf16.mxu0 0
    %449 = vmatpush1.bf16.msra.mxu0 %v155
    %450 = vmatprep.subr.bf16.mxu0 0
    %451 = vmatpush1.bf16.msra.mxu0 %v156
    %452 = vmatprep.subr.bf16.mxu0 0
    %453 = vmatpush1.bf16.msra.mxu0 %v157
    %454 = vmatprep.subr.bf16.mxu0 0
    %455 = vmatpush1.bf16.msra.mxu0 0
    %456 = vmatprep.subr.bf16.mxu0 0
    %457 = vmatpush1.bf16.msra.mxu0 0
    %458 = vmatprep.subr.bf16.mxu0 0
    %459 = vmatpush1.bf16.msra.mxu0 0
    %460 = vmatprep.subr.bf16.mxu0 0
    %461 = vmatpush1.bf16.msra.mxu0 0
    %462 = vmatprep.subr.bf16.mxu0 0
    %463 = vmatpush1.bf16.msra.mxu0 0
    %464 = vmatprep.subr.bf16.mxu0 0
    %465 = vmatpush1.bf16.msra.mxu0 0
    %466 = vmatprep.subr.bf16.mxu0 0
    %467 = vmatpush1.bf16.msra.mxu0 0
    %468 = vmatprep.subr.bf16.mxu0 0
    %469 = vmatpush1.bf16.msra.mxu0 0
    %470 = vmatprep.mubr.bf16.mxu0 0
    %471 = vmatmul.mubr.bf16.gmra.mrb[0].mxu0 %v422
    %v472 = vpop.f32.mrb[0].mxu0
    %v473 = vadd.f32 %v328, %v472
    %v474 = vpop.f32.mrb[0].mxu0
    %v475 = vpop.f32.mrb[0].mxu0
    %v476 = vadd.f32 %v331, %v475
    %v477 = vpop.f32.mrb[0].mxu0
    %478 = vmatprep.mubr.bf16.mxu0 0
    %479 = vmatmul.mubr.bf16.gmra.mrb[0].mxu0 %v423
    %v480 = vpop.f32.mrb[0].mxu0
    %v481 = vadd.f32 %v336, %v480
    %v482 = vpop.f32.mrb[0].mxu0
    %v483 = vpop.f32.mrb[0].mxu0
    %v484 = vadd.f32 %v339, %v483
    %v485 = vpop.f32.mrb[0].mxu0
    %486 = vmatprep.mubr.bf16.mxu0 0
    %487 = vmatmul.mubr.bf16.gmra.mrb[0].mxu0 %v424
    %v488 = vpop.f32.mrb[0].mxu0
    %v489 = vadd.f32 %v344, %v488
    %v490 = vpop.f32.mrb[0].mxu0
    %v491 = vpop.f32.mrb[0].mxu0
    %v492 = vadd.f32 %v347, %v491
    %v493 = vpop.f32.mrb[0].mxu0
    %494 = vmatprep.mubr.bf16.mxu0 0
    %495 = vmatmul.mubr.bf16.gmra.mrb[0].mxu0 %v425
    %v496 = vpop.f32.mrb[0].mxu0
    %v497 = vadd.f32 %v352, %v496
    %v498 = vpop.f32.mrb[0].mxu0
    %v499 = vpop.f32.mrb[0].mxu0
    %v500 = vadd.f32 %v355, %v499
    %v501 = vpop.f32.mrb[0].mxu0
    %502 = vmatprep.mubr.bf16.mxu0 0
    %503 = vmatmul.mubr.bf16.gmra.mrb[0].mxu0 %v426
    %v504 = vpop.f32.mrb[0].mxu0
    %v505 = vadd.f32 %v360, %v504
    %v506 = vpop.f32.mrb[0].mxu0
    %v507 = vpop.f32.mrb[0].mxu0
    %v508 = vadd.f32 %v363, %v507
    %v509 = vpop.f32.mrb[0].mxu0
    %510 = vmatprep.mubr.bf16.mxu0 0
    %511 = vmatmul.mubr.bf16.gmra.mrb[0].mxu0 %v427
    %v512 = vpop.f32.mrb[0].mxu0
    %v513 = vadd.f32 %v368, %v512
    %v514 = vpop.f32.mrb[0].mxu0
    %v515 = vpop.f32.mrb[0].mxu0
    %v516 = vadd.f32 %v371, %v515
    %v517 = vpop.f32.mrb[0].mxu0
    %518 = vmatprep.mubr.bf16.mxu0 0
    %519 = vmatmul.mubr.bf16.gmra.mrb[0].mxu0 %v428
    %v520 = vpop.f32.mrb[0].mxu0
    %v521 = vadd.f32 %v376, %v520
    %v522 = vpop.f32.mrb[0].mxu0
    %v523 = vpop.f32.mrb[0].mxu0
    %v524 = vadd.f32 %v379, %v523
    %v525 = vpop.f32.mrb[0].mxu0
    %526 = vmatprep.mubr.bf16.mxu0 0
    %527 = vmatmul.mubr.bf16.gmra.mrb[0].mxu0 %v429
    %v528 = vpop.f32.mrb[0].mxu0
    %v529 = vadd.f32 %v384, %v528
    %v530 = vpop.f32.mrb[0].mxu0
    %v531 = vpop.f32.mrb[0].mxu0
    %v532 = vadd.f32 %v387, %v531
    %v533 = vpop.f32.mrb[0].mxu0
    %534 = vdwg.mxu0
    %v535 = vmax.f32 %v473, 0.0
    %v536 = vmax.f32 %v476, 0.0
    %v537 = vmax.f32 %v481, 0.0
    %v538 = vmax.f32 %v484, 0.0
    %v539 = vmax.f32 %v489, 0.0
    %v540 = vmax.f32 %v492, 0.0
    %v541 = vmax.f32 %v497, 0.0
    %v542 = vmax.f32 %v500, 0.0
    %v543 = vmax.f32 %v505, 0.0
    %v544 = vmax.f32 %v508, 0.0
    %v545 = vmax.f32 %v513, 0.0
    %v546 = vmax.f32 %v516, 0.0
    %v547 = vmax.f32 %v521, 0.0
    %v548 = vmax.f32 %v524, 0.0
    %v549 = vmax.f32 %v529, 0.0
    %v550 = vmax.f32 %v532, 0.0
    %v551 = vld [vmem:[#allocation8] sm:$0xf]
    %v552 = vld [vmem:[#allocation8 + $0x4] sm:$0xf]
    %v553 = vld [vmem:[#allocation8 + $0x8] sm:$0xf]
    %v554 = vld [vmem:[#allocation8 + $0xc] sm:$0xf]
    %v555 = vld [vmem:[#allocation8 + $0x10] sm:$0xf]
    %v556 = vld [vmem:[#allocation8 + $0x14] sm:$0xf]
    %v557 = vld [vmem:[#allocation8 + $0x18] sm:$0xf]
    %v558 = vld [vmem:[#allocation8 + $0x1c] sm:$0xf]
    %v559 = vld [vmem:[#allocation8 + $0x20] sm:$0xf]
    %v560 = vld [vmem:[#allocation8 + $0x24] sm:$0xf]
    %v561 = vld [vmem:[#allocation8 + $0x28] sm:$0xf]
    %v562 = vld [vmem:[#allocation8 + $0x2c] sm:$0xf]
    %v563 = vld [vmem:[#allocation8 + $0x30] sm:$0xf]
    %v564 = vld [vmem:[#allocation8 + $0x34] sm:$0xf]
    %v565 = vld [vmem:[#allocation8 + $0x38] sm:$0xf]
    %v566 = vld [vmem:[#allocation8 + $0x3c] sm:$0xf]
    %v567 = vpack.c.bf16 %v536, %v535
    %v568 = vpack.c.bf16 %v538, %v537
    %v569 = vpack.c.bf16 %v540, %v539
    %v570 = vpack.c.bf16 %v542, %v541
    %v571 = vpack.c.bf16 %v544, %v543
    %v572 = vpack.c.bf16 %v546, %v545
    %v573 = vpack.c.bf16 %v548, %v547
    %v574 = vpack.c.bf16 %v550, %v549
    %s575 = sadd.f32 %s133, 1.0
    %v576 = vstv %s575
    %v577 = vmul.f32 %v576, %v117
    %v578 = vmul.f32 %v576, %v118
    %v579 = vmul.f32 %v576, %v119
    %v580 = vmul.f32 %v576, %v120
    %v581 = vmul.f32 %v576, %v121
    %v582 = vmul.f32 %v576, %v122
    %v583 = vmul.f32 %v576, %v123
    %v584 = vmul.f32 %v576, %v124
    %v585 = vmul.f32 %v576, %v125
    %v586 = vmul.f32 %v576, %v126
    %v587 = vmul.f32 %v576, %v127
    %v588 = vmul.f32 %v576, %v128
    %v589 = vmul.f32 %v576, %v129
    %v590 = vmul.f32 %v576, %v130
    %v591 = vmul.f32 %v576, %v131
    %v592 = vmul.f32 %v576, %v132
    %v609 = vunpack.c.l.b16 %v551
    %v610 = vunpack.c.l.b16 %v552
    %v611 = vunpack.c.l.b16 %v553
    %v612 = vunpack.c.l.b16 %v554
    %v613 = vunpack.c.l.b16 %v555
    %v614 = vunpack.c.l.b16 %v556
    %v615 = vunpack.c.l.b16 %v557
    %v616 = vunpack.c.l.b16 %v558
    %v617 = vunpack.c.l.b16 %v559
    %v618 = vunpack.c.l.b16 %v560
    %v619 = vunpack.c.l.b16 %v561
    %v620 = vunpack.c.l.b16 %v562
    %v621 = vunpack.c.l.b16 %v563
    %v622 = vunpack.c.l.b16 %v564
    %v623 = vunpack.c.l.b16 %v565
    %v624 = vunpack.c.l.b16 %v566
    %v625 = vpack.c.b16 %v610, %v609
    %v626 = vpack.c.b16 %v612, %v611
    %v627 = vpack.c.b16 %v614, %v613
    %v628 = vpack.c.b16 %v616, %v615
    %v629 = vpack.c.b16 %v618, %v617
    %v630 = vpack.c.b16 %v620, %v619
    %v631 = vpack.c.b16 %v622, %v621
    %v632 = vpack.c.b16 %v624, %v623
    %641 = vmatprep.subr.bf16.mxu0 0
    %642 = vmatpush1.bf16.msra.mxu0 %v567
    %643 = vmatprep.subr.bf16.mxu0 0
    %644 = vmatpush1.bf16.msra.mxu0 %v568
    %645 = vmatprep.subr.bf16.mxu0 0
    %646 = vmatpush1.bf16.msra.mxu0 %v569
    %647 = vmatprep.subr.bf16.mxu0 0
    %648 = vmatpush1.bf16.msra.mxu0 %v570
    %649 = vmatprep.subr.bf16.mxu0 0
    %650 = vmatpush1.bf16.msra.mxu0 %v571
    %651 = vmatprep.subr.bf16.mxu0 0
    %652 = vmatpush1.bf16.msra.mxu0 %v572
    %653 = vmatprep.subr.bf16.mxu0 0
    %654 = vmatpush1.bf16.msra.mxu0 %v573
    %655 = vmatprep.subr.bf16.mxu0 0
    %656 = vmatpush1.bf16.msra.mxu0 %v574
    %657 = vmatprep.subr.bf16.mxu0 0
    %658 = vmatpush1.bf16.msra.mxu0 0
    %659 = vmatprep.subr.bf16.mxu0 0
    %660 = vmatpush1.bf16.msra.mxu0 0
    %661 = vmatprep.subr.bf16.mxu0 0
    %662 = vmatpush1.bf16.msra.mxu0 0
    %663 = vmatprep.subr.bf16.mxu0 0
    %664 = vmatpush1.bf16.msra.mxu0 0
    %665 = vmatprep.subr.bf16.mxu0 0
    %666 = vmatpush1.bf16.msra.mxu0 0
    %667 = vmatprep.subr.bf16.mxu0 0
    %668 = vmatpush1.bf16.msra.mxu0 0
    %669 = vmatprep.subr.bf16.mxu0 0
    %670 = vmatpush1.bf16.msra.mxu0 0
    %671 = vmatprep.subr.bf16.mxu0 0
    %672 = vmatpush1.bf16.msra.mxu0 0
    %673 = vmatprep.mubr.bf16.mxu0 0
    %674 = vmatmul.mubr.bf16.gmra.mrb[0].mxu0 %v625
    %v675 = vpop.f32.mrb[0].mxu0
    %v676 = vadd.f32 %v577, %v675
    %v677 = vpop.f32.mrb[0].mxu0
    %v678 = vpop.f32.mrb[0].mxu0
    %v679 = vadd.f32 %v578, %v678
    %v680 = vpop.f32.mrb[0].mxu0
    %681 = vmatprep.mubr.bf16.mxu0 0
    %682 = vmatmul.mubr.bf16.gmra.mrb[0].mxu0 %v626
    %v683 = vpop.f32.mrb[0].mxu0
    %v684 = vadd.f32 %v579, %v683
    %v685 = vpop.f32.mrb[0].mxu0
    %v686 = vpop.f32.mrb[0].mxu0
    %v687 = vadd.f32 %v580, %v686
    %v688 = vpop.f32.mrb[0].mxu0
    %689 = vmatprep.mubr.bf16.mxu0 0
    %690 = vmatmul.mubr.bf16.gmra.mrb[0].mxu0 %v627
    %v691 = vpop.f32.mrb[0].mxu0
    %v692 = vadd.f32 %v581, %v691
    %v693 = vpop.f32.mrb[0].mxu0
    %v694 = vpop.f32.mrb[0].mxu0
    %v695 = vadd.f32 %v582, %v694
    %v696 = vpop.f32.mrb[0].mxu0
    %697 = vmatprep.mubr.bf16.mxu0 0
    %698 = vmatmul.mubr.bf16.gmra.mrb[0].mxu0 %v628
    %v699 = vpop.f32.mrb[0].mxu0
    %v700 = vadd.f32 %v583, %v699
    %v701 = vpop.f32.mrb[0].mxu0
    %v702 = vpop.f32.mrb[0].mxu0
    %v703 = vadd.f32 %v584, %v702
    %v704 = vpop.f32.mrb[0].mxu0
    %705 = vmatprep.mubr.bf16.mxu0 0
    %706 = vmatmul.mubr.bf16.gmra.mrb[0].mxu0 %v629
    %v707 = vpop.f32.mrb[0].mxu0
    %v708 = vadd.f32 %v585, %v707
    %v709 = vpop.f32.mrb[0].mxu0
    %v710 = vpop.f32.mrb[0].mxu0
    %v711 = vadd.f32 %v586, %v710
    %v712 = vpop.f32.mrb[0].mxu0
    %713 = vmatprep.mubr.bf16.mxu0 0
    %714 = vmatmul.mubr.bf16.gmra.mrb[0].mxu0 %v630
    %v715 = vpop.f32.mrb[0].mxu0
    %v716 = vadd.f32 %v587, %v715
    %v717 = vpop.f32.mrb[0].mxu0
    %v718 = vpop.f32.mrb[0].mxu0
    %v719 = vadd.f32 %v588, %v718
    %v720 = vpop.f32.mrb[0].mxu0
    %721 = vmatprep.mubr.bf16.mxu0 0
    %722 = vmatmul.mubr.bf16.gmra.mrb[0].mxu0 %v631
    %v723 = vpop.f32.mrb[0].mxu0
    %v724 = vadd.f32 %v589, %v723
    %v725 = vpop.f32.mrb[0].mxu0
    %v726 = vpop.f32.mrb[0].mxu0
    %v727 = vadd.f32 %v590, %v726
    %v728 = vpop.f32.mrb[0].mxu0
    %729 = vmatprep.mubr.bf16.mxu0 0
    %730 = vmatmul.mubr.bf16.gmra.mrb[0].mxu0 %v632
    %v731 = vpop.f32.mrb[0].mxu0
    %v732 = vadd.f32 %v591, %v731
    %v733 = vpop.f32.mrb[0].mxu0
    %v734 = vpop.f32.mrb[0].mxu0
    %v735 = vadd.f32 %v592, %v734
    %v736 = vpop.f32.mrb[0].mxu0
    %737 = vdwg.mxu0
    %v738 = vpack.c.bf16 %v679, %v676
    %v739 = vpack.c.bf16 %v687, %v684
    %v740 = vpack.c.bf16 %v695, %v692
    %v741 = vpack.c.bf16 %v703, %v700
    %v742 = vpack.c.bf16 %v711, %v708
    %v743 = vpack.c.bf16 %v719, %v716
    %v744 = vpack.c.bf16 %v727, %v724
    %v745 = vpack.c.bf16 %v735, %v732
    %v746 = vld [vmem:[#allocation12] sm:$0xf]
    %v747 = vld [vmem:[#allocation12 + $0x4] sm:$0xf]
    %v748 = vld [vmem:[#allocation12 + $0x8] sm:$0xf]
    %v749 = vld [vmem:[#allocation12 + $0xc] sm:$0xf]
    %v750 = vld [vmem:[#allocation12 + $0x10] sm:$0xf]
    %v751 = vld [vmem:[#allocation12 + $0x14] sm:$0xf]
    %v752 = vld [vmem:[#allocation12 + $0x18] sm:$0xf]
    %v753 = vld [vmem:[#allocation12 + $0x1c] sm:$0xf]
    %v754 = vld [vmem:[#allocation12 + $0x20] sm:$0xf]
    %v755 = vld [vmem:[#allocation12 + $0x24] sm:$0xf]
    %v756 = vld [vmem:[#allocation12 + $0x28] sm:$0xf]
    %v757 = vld [vmem:[#allocation12 + $0x2c] sm:$0xf]
    %v758 = vld [vmem:[#allocation12 + $0x30] sm:$0xf]
    %v759 = vld [vmem:[#allocation12 + $0x34] sm:$0xf]
    %v760 = vld [vmem:[#allocation12 + $0x38] sm:$0xf]
    %v761 = vld [vmem:[#allocation12 + $0x3c] sm:$0xf]
    %v762 = vld [vmem:[%s8] sm:$0x1]
    %v764 = vlaneseq
    %v765 = vshrl.u32 %v764, 7
    %v766 = vsub.s32 0, %v765
    %v767 = vrot.slane %v762, %v766
    %v785 = vunpack.c.l.b16 %v746
    %v786 = vunpack.c.l.b16 %v747
    %v787 = vunpack.c.l.b16 %v748
    %v788 = vunpack.c.l.b16 %v749
    %v789 = vunpack.c.l.b16 %v750
    %v790 = vunpack.c.l.b16 %v751
    %v791 = vunpack.c.l.b16 %v752
    %v792 = vunpack.c.l.b16 %v753
    %v793 = vunpack.c.l.b16 %v754
    %v794 = vunpack.c.l.b16 %v755
    %v795 = vunpack.c.l.b16 %v756
    %v796 = vunpack.c.l.b16 %v757
    %v797 = vunpack.c.l.b16 %v758
    %v798 = vunpack.c.l.b16 %v759
    %v799 = vunpack.c.l.b16 %v760
    %v800 = vunpack.c.l.b16 %v761
    %v801 = vpack.c.b16 %v786, %v785
    %v802 = vpack.c.b16 %v788, %v787
    %v803 = vpack.c.b16 %v790, %v789
    %v804 = vpack.c.b16 %v792, %v791
    %v805 = vpack.c.b16 %v794, %v793
    %v806 = vpack.c.b16 %v796, %v795
    %v807 = vpack.c.b16 %v798, %v797
    %v808 = vpack.c.b16 %v800, %v799
    %817 = vmatprep.subr.bf16.mxu0 0
    %818 = vmatpush1.bf16.msra.mxu0 %v801
    %819 = vmatprep.subr.bf16.mxu0 0
    %820 = vmatpush1.bf16.msra.mxu0 %v802
    %821 = vmatprep.subr.bf16.mxu0 0
    %822 = vmatpush1.bf16.msra.mxu0 %v803
    %823 = vmatprep.subr.bf16.mxu0 0
    %824 = vmatpush1.bf16.msra.mxu0 %v804
    %825 = vmatprep.subr.bf16.mxu0 0
    %826 = vmatpush1.bf16.msra.mxu0 %v805
    %827 = vmatprep.subr.bf16.mxu0 0
    %828 = vmatpush1.bf16.msra.mxu0 %v806
    %829 = vmatprep.subr.bf16.mxu0 0
    %830 = vmatpush1.bf16.msra.mxu0 %v807
    %831 = vmatprep.subr.bf16.mxu0 0
    %832 = vmatpush1.bf16.msra.mxu0 %v808
    %833 = vmatprep.subr.bf16.mxu0 0
    %834 = vmatpush1.bf16.msra.mxu0 0
    %835 = vmatprep.subr.bf16.mxu0 0
    %836 = vmatpush1.bf16.msra.mxu0 0
    %837 = vmatprep.subr.bf16.mxu0 0
    %838 = vmatpush1.bf16.msra.mxu0 0
    %839 = vmatprep.subr.bf16.mxu0 0
    %840 = vmatpush1.bf16.msra.mxu0 0
    %841 = vmatprep.subr.bf16.mxu0 0
    %842 = vmatpush1.bf16.msra.mxu0 0
    %843 = vmatprep.subr.bf16.mxu0 0
    %844 = vmatpush1.bf16.msra.mxu0 0
    %845 = vmatprep.subr.bf16.mxu0 0
    %846 = vmatpush1.bf16.msra.mxu0 0
    %847 = vmatprep.subr.bf16.mxu0 0
    %848 = vmatpush1.bf16.msra.mxu0 0
    %849 = vmatprep.mubr.bf16.mxu0 0
    %850 = vmatmul.mubr.bf16.gmra.mrb[0].mxu0 %v738
    %v851 = vpop.f32.mrb[0].mxu0
    %v852 = vadd.f32 %v767, %v851
    %v853 = vpop.f32.mrb[0].mxu0
    %v854 = vpop.f32.mrb[0].mxu0
    %v855 = vadd.f32 %v767, %v854
    %v856 = vpop.f32.mrb[0].mxu0
    %857 = vmatprep.mubr.bf16.mxu0 0
    %858 = vmatmul.mubr.bf16.gmra.mrb[0].mxu0 %v739
    %v859 = vpop.f32.mrb[0].mxu0
    %v860 = vadd.f32 %v767, %v859
    %v861 = vpop.f32.mrb[0].mxu0
    %v862 = vpop.f32.mrb[0].mxu0
    %v863 = vadd.f32 %v767, %v862
    %v864 = vpop.f32.mrb[0].mxu0
    %865 = vmatprep.mubr.bf16.mxu0 0
    %866 = vmatmul.mubr.bf16.gmra.mrb[0].mxu0 %v740
    %v867 = vpop.f32.mrb[0].mxu0
    %v868 = vadd.f32 %v767, %v867
    %v869 = vpop.f32.mrb[0].mxu0
    %v870 = vpop.f32.mrb[0].mxu0
    %v871 = vadd.f32 %v767, %v870
    %v872 = vpop.f32.mrb[0].mxu0
    %873 = vmatprep.mubr.bf16.mxu0 0
    %874 = vmatmul.mubr.bf16.gmra.mrb[0].mxu0 %v741
    %v875 = vpop.f32.mrb[0].mxu0
    %v876 = vadd.f32 %v767, %v875
    %v877 = vpop.f32.mrb[0].mxu0
    %v878 = vpop.f32.mrb[0].mxu0
    %v879 = vadd.f32 %v767, %v878
    %v880 = vpop.f32.mrb[0].mxu0
    %881 = vmatprep.mubr.bf16.mxu0 0
    %882 = vmatmul.mubr.bf16.gmra.mrb[0].mxu0 %v742
    %v883 = vpop.f32.mrb[0].mxu0
    %v884 = vadd.f32 %v767, %v883
    %v885 = vpop.f32.mrb[0].mxu0
    %v886 = vpop.f32.mrb[0].mxu0
    %v887 = vadd.f32 %v767, %v886
    %v888 = vpop.f32.mrb[0].mxu0
    %889 = vmatprep.mubr.bf16.mxu0 0
    %890 = vmatmul.mubr.bf16.gmra.mrb[0].mxu0 %v743
    %v891 = vpop.f32.mrb[0].mxu0
    %v892 = vadd.f32 %v767, %v891
    %v893 = vpop.f32.mrb[0].mxu0
    %v894 = vpop.f32.mrb[0].mxu0
    %v895 = vadd.f32 %v767, %v894
    %v896 = vpop.f32.mrb[0].mxu0
    %897 = vmatprep.mubr.bf16.mxu0 0
    %898 = vmatmul.mubr.bf16.gmra.mrb[0].mxu0 %v744
    %v899 = vpop.f32.mrb[0].mxu0
    %v900 = vadd.f32 %v767, %v899
    %v901 = vpop.f32.mrb[0].mxu0
    %v902 = vpop.f32.mrb[0].mxu0
    %v903 = vadd.f32 %v767, %v902
    %v904 = vpop.f32.mrb[0].mxu0
    %905 = vmatprep.mubr.bf16.mxu0 0
    %906 = vmatmul.mubr.bf16.gmra.mrb[0].mxu0 %v745
    %v907 = vpop.f32.mrb[0].mxu0
    %v908 = vadd.f32 %v767, %v907
    %v909 = vpop.f32.mrb[0].mxu0
    %v910 = vpop.f32.mrb[0].mxu0
    %v911 = vadd.f32 %v767, %v910
    %v912 = vpop.f32.mrb[0].mxu0
    %913 = vdwg.mxu0
    %v914 = vmax.f32 %v852, 0.0
    %v915 = vmax.f32 %v855, 0.0
    %v916 = vmax.f32 %v860, 0.0
    %v917 = vmax.f32 %v863, 0.0
    %v918 = vmax.f32 %v868, 0.0
    %v919 = vmax.f32 %v871, 0.0
    %v920 = vmax.f32 %v876, 0.0
    %v921 = vmax.f32 %v879, 0.0
    %v922 = vmax.f32 %v884, 0.0
    %v923 = vmax.f32 %v887, 0.0
    %v924 = vmax.f32 %v892, 0.0
    %v925 = vmax.f32 %v895, 0.0
    %v926 = vmax.f32 %v900, 0.0
    %v927 = vmax.f32 %v903, 0.0
    %v928 = vmax.f32 %v908, 0.0
    %v929 = vmax.f32 %v911, 0.0
    %v930 = vpack.c.bf16 %v915, %v914
    %v931 = vpack.c.bf16 %v917, %v916
    %v932 = vpack.c.bf16 %v919, %v918
    %v933 = vpack.c.bf16 %v921, %v920
    %v934 = vpack.c.bf16 %v923, %v922
    %v935 = vpack.c.bf16 %v925, %v924
    %v936 = vpack.c.bf16 %v927, %v926
    %v937 = vpack.c.bf16 %v929, %v928
    %s938 = scalar_lea.vmem [#allocation12], 64
    %v939 = vld [vmem:[%s938] sm:$0xf]
    %v940 = vld [vmem:[%s938 + $0x4] sm:$0xf]
    %v941 = vld [vmem:[%s938 + $0x8] sm:$0xf]
    %v942 = vld [vmem:[%s938 + $0xc] sm:$0xf]
    %v943 = vld [vmem:[%s938 + $0x10] sm:$0xf]
    %v944 = vld [vmem:[%s938 + $0x14] sm:$0xf]
    %v945 = vld [vmem:[%s938 + $0x18] sm:$0xf]
    %v946 = vld [vmem:[%s938 + $0x1c] sm:$0xf]
    %v947 = vld [vmem:[%s938 + $0x20] sm:$0xf]
    %v948 = vld [vmem:[%s938 + $0x24] sm:$0xf]
    %v949 = vld [vmem:[%s938 + $0x28] sm:$0xf]
    %v950 = vld [vmem:[%s938 + $0x2c] sm:$0xf]
    %v951 = vld [vmem:[%s938 + $0x30] sm:$0xf]
    %v952 = vld [vmem:[%s938 + $0x34] sm:$0xf]
    %v953 = vld [vmem:[%s938 + $0x38] sm:$0xf]
    %v954 = vld [vmem:[%s938 + $0x3c] sm:$0xf]
    %s955 = scalar_lea.vmem %s8, 1
    %v956 = vld [vmem:[%s955] sm:$0x1]
    %v958 = vlaneseq
    %v959 = vshrl.u32 %v958, 7
    %v960 = vsub.s32 0, %v959
    %v961 = vrot.slane %v956, %v960
    %v979 = vunpack.c.l.b16 %v939
    %v980 = vunpack.c.l.b16 %v940
    %v981 = vunpack.c.l.b16 %v941
    %v982 = vunpack.c.l.b16 %v942
    %v983 = vunpack.c.l.b16 %v943
    %v984 = vunpack.c.l.b16 %v944
    %v985 = vunpack.c.l.b16 %v945
    %v986 = vunpack.c.l.b16 %v946
    %v987 = vunpack.c.l.b16 %v947
    %v988 = vunpack.c.l.b16 %v948
    %v989 = vunpack.c.l.b16 %v949
    %v990 = vunpack.c.l.b16 %v950
    %v991 = vunpack.c.l.b16 %v951
    %v992 = vunpack.c.l.b16 %v952
    %v993 = vunpack.c.l.b16 %v953
    %v994 = vunpack.c.l.b16 %v954
    %v995 = vpack.c.b16 %v980, %v979
    %v996 = vpack.c.b16 %v982, %v981
    %v997 = vpack.c.b16 %v984, %v983
    %v998 = vpack.c.b16 %v986, %v985
    %v999 = vpack.c.b16 %v988, %v987
    %v1000 = vpack.c.b16 %v990, %v989
    %v1001 = vpack.c.b16 %v992, %v991
    %v1002 = vpack.c.b16 %v994, %v993
    %1011 = vmatprep.subr.bf16.mxu0 0
    %1012 = vmatpush1.bf16.msra.mxu0 %v995
    %1013 = vmatprep.subr.bf16.mxu0 0
    %1014 = vmatpush1.bf16.msra.mxu0 %v996
    %1015 = vmatprep.subr.bf16.mxu0 0
    %1016 = vmatpush1.bf16.msra.mxu0 %v997
    %1017 = vmatprep.subr.bf16.mxu0 0
    %1018 = vmatpush1.bf16.msra.mxu0 %v998
    %1019 = vmatprep.subr.bf16.mxu0 0
    %1020 = vmatpush1.bf16.msra.mxu0 %v999
    %1021 = vmatprep.subr.bf16.mxu0 0
    %1022 = vmatpush1.bf16.msra.mxu0 %v1000
    %1023 = vmatprep.subr.bf16.mxu0 0
    %1024 = vmatpush1.bf16.msra.mxu0 %v1001
    %1025 = vmatprep.subr.bf16.mxu0 0
    %1026 = vmatpush1.bf16.msra.mxu0 %v1002
    %1027 = vmatprep.subr.bf16.mxu0 0
    %1028 = vmatpush1.bf16.msra.mxu0 0
    %1029 = vmatprep.subr.bf16.mxu0 0
    %1030 = vmatpush1.bf16.msra.mxu0 0
    %1031 = vmatprep.subr.bf16.mxu0 0
    %1032 = vmatpush1.bf16.msra.mxu0 0
    %1033 = vmatprep.subr.bf16.mxu0 0
    %1034 = vmatpush1.bf16.msra.mxu0 0
    %1035 = vmatprep.subr.bf16.mxu0 0
    %1036 = vmatpush1.bf16.msra.mxu0 0
    %1037 = vmatprep.subr.bf16.mxu0 0
    %1038 = vmatpush1.bf16.msra.mxu0 0
    %1039 = vmatprep.subr.bf16.mxu0 0
    %1040 = vmatpush1.bf16.msra.mxu0 0
    %1041 = vmatprep.subr.bf16.mxu0 0
    %1042 = vmatpush1.bf16.msra.mxu0 0
    %1043 = vmatprep.mubr.bf16.mxu0 0
    %1044 = vmatmul.mubr.bf16.gmra.mrb[0].mxu0 %v930
    %v1045 = vpop.f32.mrb[0].mxu0
    %v1046 = vadd.f32 %v961, %v1045
    %v1047 = vpop.f32.mrb[0].mxu0
    %v1048 = vpop.f32.mrb[0].mxu0
    %v1049 = vadd.f32 %v961, %v1048
    %v1050 = vpop.f32.mrb[0].mxu0
    %1051 = vmatprep.mubr.bf16.mxu0 0
    %1052 = vmatmul.mubr.bf16.gmra.mrb[0].mxu0 %v931
    %v1053 = vpop.f32.mrb[0].mxu0
    %v1054 = vadd.f32 %v961, %v1053
    %v1055 = vpop.f32.mrb[0].mxu0
    %v1056 = vpop.f32.mrb[0].mxu0
    %v1057 = vadd.f32 %v961, %v1056
    %v1058 = vpop.f32.mrb[0].mxu0
    %1059 = vmatprep.mubr.bf16.mxu0 0
    %1060 = vmatmul.mubr.bf16.gmra.mrb[0].mxu0 %v932
    %v1061 = vpop.f32.mrb[0].mxu0
    %v1062 = vadd.f32 %v961, %v1061
    %v1063 = vpop.f32.mrb[0].mxu0
    %v1064 = vpop.f32.mrb[0].mxu0
    %v1065 = vadd.f32 %v961, %v1064
    %v1066 = vpop.f32.mrb[0].mxu0
    %1067 = vmatprep.mubr.bf16.mxu0 0
    %1068 = vmatmul.mubr.bf16.gmra.mrb[0].mxu0 %v933
    %v1069 = vpop.f32.mrb[0].mxu0
    %v1070 = vadd.f32 %v961, %v1069
    %v1071 = vpop.f32.mrb[0].mxu0
    %v1072 = vpop.f32.mrb[0].mxu0
    %v1073 = vadd.f32 %v961, %v1072
    %v1074 = vpop.f32.mrb[0].mxu0
    %1075 = vmatprep.mubr.bf16.mxu0 0
    %1076 = vmatmul.mubr.bf16.gmra.mrb[0].mxu0 %v934
    %v1077 = vpop.f32.mrb[0].mxu0
    %v1078 = vadd.f32 %v961, %v1077
    %v1079 = vpop.f32.mrb[0].mxu0
    %v1080 = vpop.f32.mrb[0].mxu0
    %v1081 = vadd.f32 %v961, %v1080
    %v1082 = vpop.f32.mrb[0].mxu0
    %1083 = vmatprep.mubr.bf16.mxu0 0
    %1084 = vmatmul.mubr.bf16.gmra.mrb[0].mxu0 %v935
    %v1085 = vpop.f32.mrb[0].mxu0
    %v1086 = vadd.f32 %v961, %v1085
    %v1087 = vpop.f32.mrb[0].mxu0
    %v1088 = vpop.f32.mrb[0].mxu0
    %v1089 = vadd.f32 %v961, %v1088
    %v1090 = vpop.f32.mrb[0].mxu0
    %1091 = vmatprep.mubr.bf16.mxu0 0
    %1092 = vmatmul.mubr.bf16.gmra.mrb[0].mxu0 %v936
    %v1093 = vpop.f32.mrb[0].mxu0
    %v1094 = vadd.f32 %v961, %v1093
    %v1095 = vpop.f32.mrb[0].mxu0
    %v1096 = vpop.f32.mrb[0].mxu0
    %v1097 = vadd.f32 %v961, %v1096
    %v1098 = vpop.f32.mrb[0].mxu0
    %1099 = vmatprep.mubr.bf16.mxu0 0
    %1100 = vmatmul.mubr.bf16.gmra.mrb[0].mxu0 %v937
    %v1101 = vpop.f32.mrb[0].mxu0
    %v1102 = vadd.f32 %v961, %v1101
    %v1103 = vpop.f32.mrb[0].mxu0
    %v1104 = vpop.f32.mrb[0].mxu0
    %v1105 = vadd.f32 %v961, %v1104
    %v1106 = vpop.f32.mrb[0].mxu0
    %1107 = vdwg.mxu0
    %v1108 = vmax.f32 %v1046, 0.0
    %v1109 = vmax.f32 %v1049, 0.0
    %v1110 = vmax.f32 %v1054, 0.0
    %v1111 = vmax.f32 %v1057, 0.0
    %v1112 = vmax.f32 %v1062, 0.0
    %v1113 = vmax.f32 %v1065, 0.0
    %v1114 = vmax.f32 %v1070, 0.0
    %v1115 = vmax.f32 %v1073, 0.0
    %v1116 = vmax.f32 %v1078, 0.0
    %v1117 = vmax.f32 %v1081, 0.0
    %v1118 = vmax.f32 %v1086, 0.0
    %v1119 = vmax.f32 %v1089, 0.0
    %v1120 = vmax.f32 %v1094, 0.0
    %v1121 = vmax.f32 %v1097, 0.0
    %v1122 = vmax.f32 %v1102, 0.0
    %v1123 = vmax.f32 %v1105, 0.0
    %v1124 = vpack.c.bf16 %v1109, %v1108
    %v1125 = vpack.c.bf16 %v1111, %v1110
    %v1126 = vpack.c.bf16 %v1113, %v1112
    %v1127 = vpack.c.bf16 %v1115, %v1114
    %v1128 = vpack.c.bf16 %v1117, %v1116
    %v1129 = vpack.c.bf16 %v1119, %v1118
    %v1130 = vpack.c.bf16 %v1121, %v1120
    %v1131 = vpack.c.bf16 %v1123, %v1122
    %s1132 = scalar_lea.vmem [#allocation12], 128
    %v1133 = vld [vmem:[%s1132] sm:$0xf]
    %v1134 = vld [vmem:[%s1132 + $0x4] sm:$0xf]
    %v1135 = vld [vmem:[%s1132 + $0x8] sm:$0xf]
    %v1136 = vld [vmem:[%s1132 + $0xc] sm:$0xf]
    %v1137 = vld [vmem:[%s1132 + $0x10] sm:$0xf]
    %v1138 = vld [vmem:[%s1132 + $0x14] sm:$0xf]
    %v1139 = vld [vmem:[%s1132 + $0x18] sm:$0xf]
    %v1140 = vld [vmem:[%s1132 + $0x1c] sm:$0xf]
    %v1141 = vld [vmem:[%s1132 + $0x20] sm:$0xf]
    %v1142 = vld [vmem:[%s1132 + $0x24] sm:$0xf]
    %v1143 = vld [vmem:[%s1132 + $0x28] sm:$0xf]
    %v1144 = vld [vmem:[%s1132 + $0x2c] sm:$0xf]
    %v1145 = vld [vmem:[%s1132 + $0x30] sm:$0xf]
    %v1146 = vld [vmem:[%s1132 + $0x34] sm:$0xf]
    %v1147 = vld [vmem:[%s1132 + $0x38] sm:$0xf]
    %v1148 = vld [vmem:[%s1132 + $0x3c] sm:$0xf]
    %s1149 = scalar_lea.vmem %s8, 2
    %v1150 = vld [vmem:[%s1149] sm:$0x1]
    %v1152 = vlaneseq
    %v1153 = vshrl.u32 %v1152, 7
    %v1154 = vsub.s32 0, %v1153
    %v1155 = vrot.slane %v1150, %v1154
    %v1173 = vunpack.c.l.b16 %v1133
    %v1174 = vunpack.c.l.b16 %v1134
    %v1175 = vunpack.c.l.b16 %v1135
    %v1176 = vunpack.c.l.b16 %v1136
    %v1177 = vunpack.c.l.b16 %v1137
    %v1178 = vunpack.c.l.b16 %v1138
    %v1179 = vunpack.c.l.b16 %v1139
    %v1180 = vunpack.c.l.b16 %v1140
    %v1181 = vunpack.c.l.b16 %v1141
    %v1182 = vunpack.c.l.b16 %v1142
    %v1183 = vunpack.c.l.b16 %v1143
    %v1184 = vunpack.c.l.b16 %v1144
    %v1185 = vunpack.c.l.b16 %v1145
    %v1186 = vunpack.c.l.b16 %v1146
    %v1187 = vunpack.c.l.b16 %v1147
    %v1188 = vunpack.c.l.b16 %v1148
    %v1189 = vpack.c.b16 %v1174, %v1173
    %v1190 = vpack.c.b16 %v1176, %v1175
    %v1191 = vpack.c.b16 %v1178, %v1177
    %v1192 = vpack.c.b16 %v1180, %v1179
    %v1193 = vpack.c.b16 %v1182, %v1181
    %v1194 = vpack.c.b16 %v1184, %v1183
    %v1195 = vpack.c.b16 %v1186, %v1185
    %v1196 = vpack.c.b16 %v1188, %v1187
    %1205 = vmatprep.subr.bf16.mxu0 0
    %1206 = vmatpush1.bf16.msra.mxu0 %v1189
    %1207 = vmatprep.subr.bf16.mxu0 0
    %1208 = vmatpush1.bf16.msra.mxu0 %v1190
    %1209 = vmatprep.subr.bf16.mxu0 0
    %1210 = vmatpush1.bf16.msra.mxu0 %v1191
    %1211 = vmatprep.subr.bf16.mxu0 0
    %1212 = vmatpush1.bf16.msra.mxu0 %v1192
    %1213 = vmatprep.subr.bf16.mxu0 0
    %1214 = vmatpush1.bf16.msra.mxu0 %v1193
    %1215 = vmatprep.subr.bf16.mxu0 0
    %1216 = vmatpush1.bf16.msra.mxu0 %v1194
    %1217 = vmatprep.subr.bf16.mxu0 0
    %1218 = vmatpush1.bf16.msra.mxu0 %v1195
    %1219 = vmatprep.subr.bf16.mxu0 0
    %1220 = vmatpush1.bf16.msra.mxu0 %v1196
    %1221 = vmatprep.subr.bf16.mxu0 0
    %1222 = vmatpush1.bf16.msra.mxu0 0
    %1223 = vmatprep.subr.bf16.mxu0 0
    %1224 = vmatpush1.bf16.msra.mxu0 0
    %1225 = vmatprep.subr.bf16.mxu0 0
    %1226 = vmatpush1.bf16.msra.mxu0 0
    %1227 = vmatprep.subr.bf16.mxu0 0
    %1228 = vmatpush1.bf16.msra.mxu0 0
    %1229 = vmatprep.subr.bf16.mxu0 0
    %1230 = vmatpush1.bf16.msra.mxu0 0
    %1231 = vmatprep.subr.bf16.mxu0 0
    %1232 = vmatpush1.bf16.msra.mxu0 0
    %1233 = vmatprep.subr.bf16.mxu0 0
    %1234 = vmatpush1.bf16.msra.mxu0 0
    %1235 = vmatprep.subr.bf16.mxu0 0
    %1236 = vmatpush1.bf16.msra.mxu0 0
    %1237 = vmatprep.mubr.bf16.mxu0 0
    %1238 = vmatmul.mubr.bf16.gmra.mrb[0].mxu0 %v1124
    %v1239 = vpop.f32.mrb[0].mxu0
    %v1240 = vadd.f32 %v1155, %v1239
    %v1241 = vpop.f32.mrb[0].mxu0
    %v1242 = vpop.f32.mrb[0].mxu0
    %v1243 = vadd.f32 %v1155, %v1242
    %v1244 = vpop.f32.mrb[0].mxu0
    %1245 = vmatprep.mubr.bf16.mxu0 0
    %1246 = vmatmul.mubr.bf16.gmra.mrb[0].mxu0 %v1125
    %v1247 = vpop.f32.mrb[0].mxu0
    %v1248 = vadd.f32 %v1155, %v1247
    %v1249 = vpop.f32.mrb[0].mxu0
    %v1250 = vpop.f32.mrb[0].mxu0
    %v1251 = vadd.f32 %v1155, %v1250
    %v1252 = vpop.f32.mrb[0].mxu0
    %1253 = vmatprep.mubr.bf16.mxu0 0
    %1254 = vmatmul.mubr.bf16.gmra.mrb[0].mxu0 %v1126
    %v1255 = vpop.f32.mrb[0].mxu0
    %v1256 = vadd.f32 %v1155, %v1255
    %v1257 = vpop.f32.mrb[0].mxu0
    %v1258 = vpop.f32.mrb[0].mxu0
    %v1259 = vadd.f32 %v1155, %v1258
    %v1260 = vpop.f32.mrb[0].mxu0
    %1261 = vmatprep.mubr.bf16.mxu0 0
    %1262 = vmatmul.mubr.bf16.gmra.mrb[0].mxu0 %v1127
    %v1263 = vpop.f32.mrb[0].mxu0
    %v1264 = vadd.f32 %v1155, %v1263
    %v1265 = vpop.f32.mrb[0].mxu0
    %v1266 = vpop.f32.mrb[0].mxu0
    %v1267 = vadd.f32 %v1155, %v1266
    %v1268 = vpop.f32.mrb[0].mxu0
    %1269 = vmatprep.mubr.bf16.mxu0 0
    %1270 = vmatmul.mubr.bf16.gmra.mrb[0].mxu0 %v1128
    %v1271 = vpop.f32.mrb[0].mxu0
    %v1272 = vadd.f32 %v1155, %v1271
    %v1273 = vpop.f32.mrb[0].mxu0
    %v1274 = vpop.f32.mrb[0].mxu0
    %v1275 = vadd.f32 %v1155, %v1274
    %v1276 = vpop.f32.mrb[0].mxu0
    %1277 = vmatprep.mubr.bf16.mxu0 0
    %1278 = vmatmul.mubr.bf16.gmra.mrb[0].mxu0 %v1129
    %v1279 = vpop.f32.mrb[0].mxu0
    %v1280 = vadd.f32 %v1155, %v1279
    %v1281 = vpop.f32.mrb[0].mxu0
    %v1282 = vpop.f32.mrb[0].mxu0
    %v1283 = vadd.f32 %v1155, %v1282
    %v1284 = vpop.f32.mrb[0].mxu0
    %1285 = vmatprep.mubr.bf16.mxu0 0
    %1286 = vmatmul.mubr.bf16.gmra.mrb[0].mxu0 %v1130
    %v1287 = vpop.f32.mrb[0].mxu0
    %v1288 = vadd.f32 %v1155, %v1287
    %v1289 = vpop.f32.mrb[0].mxu0
    %v1290 = vpop.f32.mrb[0].mxu0
    %v1291 = vadd.f32 %v1155, %v1290
    %v1292 = vpop.f32.mrb[0].mxu0
    %1293 = vmatprep.mubr.bf16.mxu0 0
    %1294 = vmatmul.mubr.bf16.gmra.mrb[0].mxu0 %v1131
    %v1295 = vpop.f32.mrb[0].mxu0
    %v1296 = vadd.f32 %v1155, %v1295
    %v1297 = vpop.f32.mrb[0].mxu0
    %v1298 = vpop.f32.mrb[0].mxu0
    %v1299 = vadd.f32 %v1155, %v1298
    %v1300 = vpop.f32.mrb[0].mxu0
    %1301 = vdwg.mxu0
    %v1302 = vmax.f32 %v1240, 0.0
    %v1303 = vmax.f32 %v1243, 0.0
    %v1304 = vmax.f32 %v1248, 0.0
    %v1305 = vmax.f32 %v1251, 0.0
    %v1306 = vmax.f32 %v1256, 0.0
    %v1307 = vmax.f32 %v1259, 0.0
    %v1308 = vmax.f32 %v1264, 0.0
    %v1309 = vmax.f32 %v1267, 0.0
    %v1310 = vmax.f32 %v1272, 0.0
    %v1311 = vmax.f32 %v1275, 0.0
    %v1312 = vmax.f32 %v1280, 0.0
    %v1313 = vmax.f32 %v1283, 0.0
    %v1314 = vmax.f32 %v1288, 0.0
    %v1315 = vmax.f32 %v1291, 0.0
    %v1316 = vmax.f32 %v1296, 0.0
    %v1317 = vmax.f32 %v1299, 0.0
    %1318 = vst [vmem:[#allocation14] sm:$0xff] %v1302
    %1319 = vst [vmem:[#allocation14 + $0x8] sm:$0xff] %v1303
    %1320 = vst [vmem:[#allocation14 + $0x10] sm:$0xff] %v1304
    %1321 = vst [vmem:[#allocation14 + $0x18] sm:$0xff] %v1305
    %1322 = vst [vmem:[#allocation14 + $0x20] sm:$0xff] %v1306
    %1323 = vst [vmem:[#allocation14 + $0x28] sm:$0xff] %v1307
    %1324 = vst [vmem:[#allocation14 + $0x30] sm:$0xff] %v1308
    %1325 = vst [vmem:[#allocation14 + $0x38] sm:$0xff] %v1309
    %1326 = vst [vmem:[#allocation14 + $0x40] sm:$0xff] %v1310
    %1327 = vst [vmem:[#allocation14 + $0x48] sm:$0xff] %v1311
    %1328 = vst [vmem:[#allocation14 + $0x50] sm:$0xff] %v1312
    %1329 = vst [vmem:[#allocation14 + $0x58] sm:$0xff] %v1313
    %1330 = vst [vmem:[#allocation14 + $0x60] sm:$0xff] %v1314
    %1331 = vst [vmem:[#allocation14 + $0x68] sm:$0xff] %v1315
    %1332 = vst [vmem:[#allocation14 + $0x70] sm:$0xff] %v1316
    %1333 = vst [vmem:[#allocation14 + $0x78] sm:$0xff] %v1317
    // Predicated region
    $region62: #{tpu_custom_call.1} parent=1 // pred_check
      _
    $region63: #{tpu_custom_call.1} parent=1 // pred_check_branch
      %1335 = sbr.rel (0) target = $region65
    $region64: #{tpu_custom_call.1} parent=1 // pred_region
      %s1337 = ssub.s32 2048, 2048
      %1338 = vsyncadd [#allocation5], %s1337
      %s1339 = sshll.u32 [#allocation14], 4
      %s1340 = int_to_ptr.vmem [resolvable:$true] %s1339
      %1345 = dma.vmem_to_hbm [thread:$0]  %s1340, 2048, %s9, [#allocation5], 128, 128, 8
    $region65: #{tpu_custom_call.1} parent=1 // pred_fallthru
      _
    // Predicated region
    $region66: #{tpu_custom_call.1} parent=1 // pred_check
      _
    $region67: #{tpu_custom_call.1} parent=1 // pred_check_branch
      %1347 = sbr.rel (0) target = $region69
    $region68: #{tpu_custom_call.1} parent=1 // pred_region
      %1348 = dma.done [#allocation5], 2048
    $region69: #{tpu_custom_call.1} parent=1 // pred_fallthru
      _
    %1349 = vsyncpa [#allocation4], 1
    %1350 = vsyncpa [#allocation7], 1
    %1351 = vsyncpa [#allocation10], 1
    %1352 = vsyncpa [#allocation13], 1
    %1353 = vsyncpa [#allocation5], 1

</llo_original>
